<compile_context>
chip_gen: v6e
topology: v6e:2x2x1
jax: 0.10.0
libtpu: 0.0.40
codegen_flags: <defaults>
</compile_context>

<pallas_src>
import jax
import jax.numpy as jnp
from jax.experimental import pallas as pl
from jax.experimental.pallas import tpu as pltpu


# ---------------------------------------------------------------------------
# Helpers
# ---------------------------------------------------------------------------

def _round_up(x, m):
    return ((x + m - 1) // m) * m


def _pick_time_chunk(T, cap=32):
    """Pick a time-chunk length Tc with T % Tc == 0 and a valid block layout.

    Tc is the second-to-last dim of the (B, Tc, 4Hp) / (B, Tc, Hp) blocks, so
    it must be a multiple of 8 or equal to the full T.
    """
    if T <= cap:
        return T
    for d in range(cap, 0, -1):
        if T % d == 0 and d % 8 == 0:
            return d
    return T  # fall back: single chunk (block == full dim is always valid)


def _pad_gate_cols(w, H, Hp):
    """Pad the trailing 4*H gate axis to 4*Hp, padding each gate block
    [f|i|o|g] independently so gate k occupies columns [k*Hp, (k+1)*Hp)."""
    if Hp == H:
        return w
    lead = w.shape[:-1]
    w4 = w.reshape(lead + (4, H))
    w4 = jnp.pad(w4, [(0, 0)] * len(lead) + [(0, 0), (0, Hp - H)])
    return w4.reshape(lead + (4 * Hp,))


# ---------------------------------------------------------------------------
# Kernel 1: hoisted input projection  xw = x @ wx + b  (one big GEMM)
# ---------------------------------------------------------------------------

def input_proj_kernel(x_ref, wx_ref, b_ref, o_ref):
    o_ref[...] = (
        jnp.dot(x_ref[...], wx_ref[...], preferred_element_type=jnp.float32)
        + b_ref[...]
    )


# ---------------------------------------------------------------------------
# Kernel 2: the recurrence, chunked over time.
#   Per grid step: load a (B, Tc, 4Hp) pre-activation slab, run Tc unrolled
#   steps of  t = xw_t + h @ wh  -> gates -> (h, c), write the (B, Tc, Hp)
#   hidden slab.  h/c live in the resident h_final / c_final output blocks.
# ---------------------------------------------------------------------------

def lstm_recurrence_kernel(xw_ref, h0_ref, c0_ref, wh_ref,
                           fullh_ref, hout_ref, cout_ref):
    chunk = pl.program_id(0)
    Hp = hout_ref.shape[-1]
    Tc = xw_ref.shape[1]

    # Initialize the resident recurrent state from the provided h, c.
    @pl.when(chunk == 0)
    def _():
        hout_ref[...] = h0_ref[...]
        cout_ref[...] = c0_ref[...]

    wh = wh_ref[...]          # hoisted: loaded once per chunk
    h = hout_ref[...]
    c = cout_ref[...]

    # Fully unrolled inner loop over the Tc timesteps of this chunk.
    for j in range(Tc):
        t = xw_ref[:, j, :] + jnp.dot(h, wh,
                                      preferred_element_type=jnp.float32)
        # Gate slices are at multiples of Hp (multiple of 128) -> lane-aligned.
        gate = jax.nn.sigmoid(t[:, :3 * Hp])
        f_g = gate[:, 0 * Hp:1 * Hp]
        i_g = gate[:, 1 * Hp:2 * Hp]
        o_g = gate[:, 2 * Hp:3 * Hp]
        g_g = jnp.tanh(t[:, 3 * Hp:4 * Hp])

        c = c * f_g + g_g * i_g
        h = jnp.tanh(c) * o_g

        fullh_ref[:, j, :] = h      # lane-dense (Hp = multiple of 128)

    # Carry the state to the next chunk via the resident output blocks.
    hout_ref[...] = h
    cout_ref[...] = c


# ---------------------------------------------------------------------------
# Wrapper
# ---------------------------------------------------------------------------

def lstm_forward(fullx, h, c, wx, wh, b):
    B, T, I = fullx.shape
    H = h.shape[-1]
    assert wx.shape == (I, 4 * H)
    assert wh.shape == (H, 4 * H)
    assert b.shape == (1, 4 * H)

    Hp = _round_up(H, 128)            # lane-aligned internal hidden size

    f32 = jnp.float32
    wx_p = _pad_gate_cols(wx.astype(f32), H, Hp)                  # (I, 4Hp)
    wh_p = _pad_gate_cols(wh.astype(f32), H, Hp)                  # (H, 4Hp)
    wh_p = jnp.pad(wh_p, ((0, Hp - H), (0, 0)))                   # (Hp, 4Hp)
    b_p = _pad_gate_cols(b.astype(f32), H, Hp)                    # (1, 4Hp)
    h_p = jnp.pad(h.astype(f32), ((0, 0), (0, Hp - H)))           # (B, Hp)
    c_p = jnp.pad(c.astype(f32), ((0, 0), (0, Hp - H)))           # (B, Hp)

    # ---- Phase 1: xw = fullx @ wx + b as one large GEMM -------------------
    M = B * T
    x2d = fullx.reshape(M, I).astype(f32)
    tm = M if M <= 512 else 256       # full-dim block (always valid) or tiled

    xw = pl.pallas_call(
        input_proj_kernel,
        out_shape=jax.ShapeDtypeStruct((M, 4 * Hp), f32),
        grid_spec=pltpu.PrefetchScalarGridSpec(
            num_scalar_prefetch=0,
            grid=(pl.cdiv(M, tm),),
            in_specs=[
                pl.BlockSpec((tm, I), lambda m: (m, 0)),          # x rows
                pl.BlockSpec((I, 4 * Hp), lambda m: (0, 0)),      # wx
                pl.BlockSpec((1, 4 * Hp), lambda m: (0, 0)),      # b
            ],
            out_specs=pl.BlockSpec((tm, 4 * Hp), lambda m: (m, 0)),
        ),
        compiler_params=pltpu.CompilerParams(
            dimension_semantics=("parallel",)),
    )(x2d, wx_p, b_p)
    xw = xw.reshape(B, T, 4 * Hp)

    # ---- Phase 2: recurrence over time chunks ------------------------------
    Tc = _pick_time_chunk(T)

    fullh_p, h_fin_p, c_fin_p = pl.pallas_call(
        lstm_recurrence_kernel,
        out_shape=(
            jax.ShapeDtypeStruct((B, T, Hp), f32),
            jax.ShapeDtypeStruct((B, Hp), f32),
            jax.ShapeDtypeStruct((B, Hp), f32),
        ),
        grid_spec=pltpu.PrefetchScalarGridSpec(
            num_scalar_prefetch=0,
            grid=(T // Tc,),
            in_specs=[
                pl.BlockSpec((B, Tc, 4 * Hp), lambda t: (0, t, 0)),  # xw chunk
                pl.BlockSpec((B, Hp), lambda t: (0, 0)),             # h0
                pl.BlockSpec((B, Hp), lambda t: (0, 0)),             # c0
                pl.BlockSpec((Hp, 4 * Hp), lambda t: (0, 0)),        # wh
            ],
            out_specs=[
                pl.BlockSpec((B, Tc, Hp), lambda t: (0, t, 0)),      # fullh
                pl.BlockSpec((B, Hp), lambda t: (0, 0)),             # h_final
                pl.BlockSpec((B, Hp), lambda t: (0, 0)),             # c_final
            ],
        ),
        compiler_params=pltpu.CompilerParams(
            dimension_semantics=("arbitrary",)),                     # recurrent
    )(xw, h_p, c_p, wh_p)

    # Strip the internal lane padding.
    return fullh_p[:, :, :H], h_fin_p[:, :H], c_fin_p[:, :H]


# TODO(synk): batch is too small (B=2) to fill MXU rows or to usefully shard a
# parallel batch grid axis across v7x's two TensorCores at these test shapes.


# ---------------------------------------------------------------------------
# Pure-JAX reference mirroring the PyTorch forward()
# ---------------------------------------------------------------------------

def lstm_reference(fullx, h, c, wx, wh, b):
    H = h.shape[-1]
    fullh = []
    for i in range(fullx.shape[1]):
        x = fullx[:, i, :]
        t = x @ wx + h @ wh + b
        gate = jax.nn.sigmoid(t[:, :3 * H])
        f_g, i_g, o_g = (gate[:, n * H:(n + 1) * H] for n in range(3))
        g_g = jnp.tanh(t[:, 3 * H:4 * H])
        c = c * f_g + g_g * i_g
        h = jnp.tanh(c) * o_g
        fullh.append(h[:, None, :])
    return jnp.concatenate(fullh, axis=1), h, c


if __name__ == "__main__":
    B, T, I, H = 2, 8, 16, 32

    key = jax.random.PRNGKey(0)
    k_wx, k_wh, k_b, k_x, k_h, k_c = jax.random.split(key, 6)

    # Deterministic parameter init matching the module __init__ semantics:
    #   wx ~ N(0,1)/sqrt(inputnum), wh ~ N(0,1)/sqrt(hnum), b ~ U[0,1)
    wx = jax.random.normal(k_wx, (I, 4 * H), dtype=jnp.float32) / (I ** 0.5)
    wh = jax.random.normal(k_wh, (H, 4 * H), dtype=jnp.float32) / (H ** 0.5)
    b = jax.random.uniform(k_b, (1, 4 * H), dtype=jnp.float32)

    fullx = jax.random.normal(k_x, (B, T, I), dtype=jnp.float32)
    h0 = jax.random.normal(k_h, (B, H), dtype=jnp.float32)
    c0 = jax.random.normal(k_c, (B, H), dtype=jnp.float32)

    lstm_fn = jax.jit(lstm_forward)
    fullh, h_fin, c_fin = lstm_fn(fullx, h0, c0, wx, wh, b)
    jax.block_until_ready((fullh, h_fin, c_fin))

    # Correctness check against the pure-JAX reference.
    ref_fullh, ref_h, ref_c = lstm_reference(fullx, h0, c0, wx, wh, b)
    assert jnp.allclose(fullh, ref_fullh, atol=1e-5, rtol=1e-5)
    assert jnp.allclose(h_fin, ref_h, atol=1e-5, rtol=1e-5)
    assert jnp.allclose(c_fin, ref_c, atol=1e-5, rtol=1e-5)

    print("KERNEL_OK")
</pallas_src>

<mosaic_0001>
module attributes {stable_mosaic.version = 11 : i64} {
  func.func @input_proj_kernel(%arg0: i32, %arg1: memref<16x16xf32, #tpu.memory_space<vmem>>, %arg2: memref<16x512xf32, #tpu.memory_space<vmem>>, %arg3: memref<1x512xf32, #tpu.memory_space<vmem>>, %arg4: memref<16x512xf32, #tpu.memory_space<vmem>>) attributes {dimension_semantics = [#tpu.dimension_semantics<parallel>], iteration_bounds = array<i64: 1>, scalar_prefetch = 0 : i64, scratch_operands = 0 : i64, tpu.core_type = #tpu.core_type<tc>, window_params = [{transform_indices = @transform_0, window_bounds = array<i64: 16, 16>}, {pipeline_mode = #tpu.pipeline_mode<synchronous>, transform_indices = @transform_1, window_bounds = array<i64: 16, 512>}, {pipeline_mode = #tpu.pipeline_mode<synchronous>, transform_indices = @transform_2, window_bounds = array<i64: 1, 512>}, {transform_indices = @transform_3, window_bounds = array<i64: 16, 512>}]} {
    %c0 = arith.constant 0 : index
    %c0_0 = arith.constant 0 : index
    %0 = vector.load %arg1[%c0, %c0_0] : memref<16x16xf32, #tpu.memory_space<vmem>>, vector<16x16xf32>
    %c0_1 = arith.constant 0 : index
    %c0_2 = arith.constant 0 : index
    %1 = vector.load %arg2[%c0_1, %c0_2] : memref<16x512xf32, #tpu.memory_space<vmem>>, vector<16x512xf32>
    %cst = arith.constant dense<0.000000e+00> : vector<16x512xf32>
    %2 = tpu.matmul %0, %1, %cst {dimension_numbers = #tpu.dot_dimension_numbers<[1], [0], [0], [1], [0, 0, 1, 1], [], []>} : vector<16x16xf32>, vector<16x512xf32>, vector<16x512xf32> -> vector<16x512xf32>
    %c0_3 = arith.constant 0 : index
    %c0_4 = arith.constant 0 : index
    %3 = vector.load %arg3[%c0_3, %c0_4] : memref<1x512xf32, #tpu.memory_space<vmem>>, vector<1x512xf32>
    %4 = vector.broadcast %3 : vector<1x512xf32> to vector<16x512xf32>
    %5 = arith.addf %2, %4 : vector<16x512xf32>
    %c0_5 = arith.constant 0 : index
    %c0_6 = arith.constant 0 : index
    %6 = vector.load %arg4[%c0_5, %c0_6] : memref<16x512xf32, #tpu.memory_space<vmem>>, vector<16x512xf32>
    tpu.vector_store %arg4[%c0_5, %c0_6], %5 {strides = array<i32>} : memref<16x512xf32, #tpu.memory_space<vmem>>, vector<16x512xf32>,
    return
  }
  func.func @transform_0(%arg0: i32) -> (i32, i32) {
    %c0_i32 = arith.constant 0 : i32
    %c0_i32_0 = arith.constant 0 : i32
    return %arg0, %c0_i32 : i32, i32
  }
  func.func @transform_1(%arg0: i32) -> (i32, i32) {
    %c0_i32 = arith.constant 0 : i32
    %c0_i32_0 = arith.constant 0 : i32
    %c0_i32_1 = arith.constant 0 : i32
    return %c0_i32, %c0_i32_0 : i32, i32
  }
  func.func @transform_2(%arg0: i32) -> (i32, i32) {
    %c0_i32 = arith.constant 0 : i32
    %c0_i32_0 = arith.constant 0 : i32
    %c0_i32_1 = arith.constant 0 : i32
    return %c0_i32, %c0_i32_0 : i32, i32
  }
  func.func @transform_3(%arg0: i32) -> (i32, i32) {
    %c0_i32 = arith.constant 0 : i32
    %c0_i32_0 = arith.constant 0 : i32
    return %arg0, %c0_i32 : i32, i32
  }
}

module attributes {stable_mosaic.version = 11 : i64} {
  func.func @lstm_recurrence_kernel(%arg0: i32, %arg1: memref<2x8x512xf32, #tpu.memory_space<vmem>>, %arg2: memref<2x128xf32, #tpu.memory_space<vmem>>, %arg3: memref<2x128xf32, #tpu.memory_space<vmem>>, %arg4: memref<128x512xf32, #tpu.memory_space<vmem>>, %arg5: memref<2x8x128xf32, #tpu.memory_space<vmem>>, %arg6: memref<2x128xf32, #tpu.memory_space<vmem>>, %arg7: memref<2x128xf32, #tpu.memory_space<vmem>>) attributes {dimension_semantics = [#tpu.dimension_semantics<arbitrary>], iteration_bounds = array<i64: 1>, scalar_prefetch = 0 : i64, scratch_operands = 0 : i64, tpu.core_type = #tpu.core_type<tc>, window_params = [{transform_indices = @transform_0, window_bounds = array<i64: 2, 8, 512>}, {pipeline_mode = #tpu.pipeline_mode<synchronous>, transform_indices = @transform_1, window_bounds = array<i64: 2, 128>}, {pipeline_mode = #tpu.pipeline_mode<synchronous>, transform_indices = @transform_2, window_bounds = array<i64: 2, 128>}, {pipeline_mode = #tpu.pipeline_mode<synchronous>, transform_indices = @transform_3, window_bounds = array<i64: 128, 512>}, {transform_indices = @transform_4, window_bounds = array<i64: 2, 8, 128>}, {pipeline_mode = #tpu.pipeline_mode<synchronous>, transform_indices = @transform_5, window_bounds = array<i64: 2, 128>}, {pipeline_mode = #tpu.pipeline_mode<synchronous>, transform_indices = @transform_6, window_bounds = array<i64: 2, 128>}]} {
    %c0_i32 = arith.constant 0 : i32
    %0 = arith.cmpi eq, %arg0, %c0_i32 : i32
    %1 = arith.extui %0 : i1 to i32
    %c0_i32_0 = arith.constant 0 : i32
    %2 = arith.cmpi ne, %1, %c0_i32_0 : i32
    scf.if %2 {
      %c0_66 = arith.constant 0 : index
      %c0_67 = arith.constant 0 : index
      %192 = vector.load %arg2[%c0_66, %c0_67] : memref<2x128xf32, #tpu.memory_space<vmem>>, vector<2x128xf32>
      %c0_68 = arith.constant 0 : index
      %c0_69 = arith.constant 0 : index
      %193 = vector.load %arg6[%c0_68, %c0_69] : memref<2x128xf32, #tpu.memory_space<vmem>>, vector<2x128xf32>
      tpu.vector_store %arg6[%c0_68, %c0_69], %192 {strides = array<i32>} : memref<2x128xf32, #tpu.memory_space<vmem>>, vector<2x128xf32>,
      %c0_70 = arith.constant 0 : index
      %c0_71 = arith.constant 0 : index
      %194 = vector.load %arg3[%c0_70, %c0_71] : memref<2x128xf32, #tpu.memory_space<vmem>>, vector<2x128xf32>
      %c0_72 = arith.constant 0 : index
      %c0_73 = arith.constant 0 : index
      %195 = vector.load %arg7[%c0_72, %c0_73] : memref<2x128xf32, #tpu.memory_space<vmem>>, vector<2x128xf32>
      tpu.vector_store %arg7[%c0_72, %c0_73], %194 {strides = array<i32>} : memref<2x128xf32, #tpu.memory_space<vmem>>, vector<2x128xf32>,
    } else {
    }
    %c0 = arith.constant 0 : index
    %c0_1 = arith.constant 0 : index
    %3 = vector.load %arg4[%c0, %c0_1] : memref<128x512xf32, #tpu.memory_space<vmem>>, vector<128x512xf32>
    %c0_2 = arith.constant 0 : index
    %c0_3 = arith.constant 0 : index
    %4 = vector.load %arg6[%c0_2, %c0_3] : memref<2x128xf32, #tpu.memory_space<vmem>>, vector<2x128xf32>
    %c0_4 = arith.constant 0 : index
    %c0_5 = arith.constant 0 : index
    %5 = vector.load %arg7[%c0_4, %c0_5] : memref<2x128xf32, #tpu.memory_space<vmem>>, vector<2x128xf32>
    %c0_6 = arith.constant 0 : index
    %c0_7 = arith.constant 0 : index
    %c0_8 = arith.constant 0 : index
    %6 = vector.load %arg1[%c0_6, %c0_7, %c0_8] : memref<2x8x512xf32, #tpu.memory_space<vmem>>, vector<2x1x512xf32>
    %7 = vector.shape_cast %6 : vector<2x1x512xf32> to vector<2x512xf32>
    %cst = arith.constant dense<0.000000e+00> : vector<2x512xf32>
    %8 = tpu.matmul %4, %3, %cst {dimension_numbers = #tpu.dot_dimension_numbers<[1], [0], [0], [1], [0, 0, 1, 1], [], []>} : vector<2x128xf32>, vector<128x512xf32>, vector<2x512xf32> -> vector<2x512xf32>
    %9 = arith.addf %7, %8 : vector<2x512xf32>
    %10 = vector.extract_strided_slice %9 {offsets = [0, 0], sizes = [2, 384], strides = [1, 1]} : vector<2x512xf32> to vector<2x384xf32>
    %11 = arith.negf %10 : vector<2x384xf32>
    %12 = math.exp %11 : vector<2x384xf32>
    %cst_9 = arith.constant 1.000000e+00 : f32
    %13 = vector.broadcast %cst_9 : f32 to vector<2x384xf32>
    %14 = arith.addf %13, %12 : vector<2x384xf32>
    %15 = arith.divf %13, %14 : vector<2x384xf32>
    %16 = vector.extract_strided_slice %15 {offsets = [0, 0], sizes = [2, 128], strides = [1, 1]} : vector<2x384xf32> to vector<2x128xf32>
    %17 = vector.extract_strided_slice %15 {offsets = [0, 128], sizes = [2, 128], strides = [1, 1]} : vector<2x384xf32> to vector<2x128xf32>
    %18 = vector.extract_strided_slice %15 {offsets = [0, 256], sizes = [2, 128], strides = [1, 1]} : vector<2x384xf32> to vector<2x128xf32>
    %19 = vector.extract_strided_slice %9 {offsets = [0, 384], sizes = [2, 128], strides = [1, 1]} : vector<2x512xf32> to vector<2x128xf32>
    %20 = math.tanh %19 : vector<2x128xf32>
    %21 = arith.mulf %5, %16 : vector<2x128xf32>
    %22 = arith.mulf %20, %17 : vector<2x128xf32>
    %23 = arith.addf %21, %22 : vector<2x128xf32>
    %24 = math.tanh %23 : vector<2x128xf32>
    %25 = arith.mulf %24, %18 : vector<2x128xf32>
    %c0_10 = arith.constant 0 : index
    %c0_11 = arith.constant 0 : index
    %c0_12 = arith.constant 0 : index
    %26 = vector.load %arg5[%c0_10, %c0_11, %c0_12] : memref<2x8x128xf32, #tpu.memory_space<vmem>>, vector<2x1x128xf32>
    %27 = vector.shape_cast %26 : vector<2x1x128xf32> to vector<2x128xf32>
    %28 = vector.shape_cast %25 : vector<2x128xf32> to vector<2x1x128xf32>
    tpu.vector_store %arg5[%c0_10, %c0_11, %c0_12], %28 {strides = array<i32>} : memref<2x8x128xf32, #tpu.memory_space<vmem>>, vector<2x1x128xf32>,
    %c0_13 = arith.constant 0 : index
    %c1 = arith.constant 1 : index
    %c0_14 = arith.constant 0 : index
    %29 = vector.load %arg1[%c0_13, %c1, %c0_14] : memref<2x8x512xf32, #tpu.memory_space<vmem>>, vector<2x1x512xf32>
    %30 = vector.shape_cast %29 : vector<2x1x512xf32> to vector<2x512xf32>
    %cst_15 = arith.constant dense<0.000000e+00> : vector<2x512xf32>
    %31 = tpu.matmul %25, %3, %cst_15 {dimension_numbers = #tpu.dot_dimension_numbers<[1], [0], [0], [1], [0, 0, 1, 1], [], []>} : vector<2x128xf32>, vector<128x512xf32>, vector<2x512xf32> -> vector<2x512xf32>
    %32 = arith.addf %30, %31 : vector<2x512xf32>
    %33 = vector.extract_strided_slice %32 {offsets = [0, 0], sizes = [2, 384], strides = [1, 1]} : vector<2x512xf32> to vector<2x384xf32>
    %34 = arith.negf %33 : vector<2x384xf32>
    %35 = math.exp %34 : vector<2x384xf32>
    %cst_16 = arith.constant 1.000000e+00 : f32
    %36 = vector.broadcast %cst_16 : f32 to vector<2x384xf32>
    %37 = arith.addf %36, %35 : vector<2x384xf32>
    %38 = arith.divf %36, %37 : vector<2x384xf32>
    %39 = vector.extract_strided_slice %38 {offsets = [0, 0], sizes = [2, 128], strides = [1, 1]} : vector<2x384xf32> to vector<2x128xf32>
    %40 = vector.extract_strided_slice %38 {offsets = [0, 128], sizes = [2, 128], strides = [1, 1]} : vector<2x384xf32> to vector<2x128xf32>
    %41 = vector.extract_strided_slice %38 {offsets = [0, 256], sizes = [2, 128], strides = [1, 1]} : vector<2x384xf32> to vector<2x128xf32>
    %42 = vector.extract_strided_slice %32 {offsets = [0, 384], sizes = [2, 128], strides = [1, 1]} : vector<2x512xf32> to vector<2x128xf32>
    %43 = math.tanh %42 : vector<2x128xf32>
    %44 = arith.mulf %23, %39 : vector<2x128xf32>
    %45 = arith.mulf %43, %40 : vector<2x128xf32>
    %46 = arith.addf %44, %45 : vector<2x128xf32>
    %47 = math.tanh %46 : vector<2x128xf32>
    %48 = arith.mulf %47, %41 : vector<2x128xf32>
    %c0_17 = arith.constant 0 : index
    %c1_18 = arith.constant 1 : index
    %c0_19 = arith.constant 0 : index
    %49 = vector.load %arg5[%c0_17, %c1_18, %c0_19] : memref<2x8x128xf32, #tpu.memory_space<vmem>>, vector<2x1x128xf32>
    %50 = vector.shape_cast %49 : vector<2x1x128xf32> to vector<2x128xf32>
    %51 = vector.shape_cast %48 : vector<2x128xf32> to vector<2x1x128xf32>
    tpu.vector_store %arg5[%c0_17, %c1_18, %c0_19], %51 {strides = array<i32>} : memref<2x8x128xf32, #tpu.memory_space<vmem>>, vector<2x1x128xf32>,
    %c0_20 = arith.constant 0 : index
    %c2 = arith.constant 2 : index
    %c0_21 = arith.constant 0 : index
    %52 = vector.load %arg1[%c0_20, %c2, %c0_21] : memref<2x8x512xf32, #tpu.memory_space<vmem>>, vector<2x1x512xf32>
    %53 = vector.shape_cast %52 : vector<2x1x512xf32> to vector<2x512xf32>
    %cst_22 = arith.constant dense<0.000000e+00> : vector<2x512xf32>
    %54 = tpu.matmul %48, %3, %cst_22 {dimension_numbers = #tpu.dot_dimension_numbers<[1], [0], [0], [1], [0, 0, 1, 1], [], []>} : vector<2x128xf32>, vector<128x512xf32>, vector<2x512xf32> -> vector<2x512xf32>
    %55 = arith.addf %53, %54 : vector<2x512xf32>
    %56 = vector.extract_strided_slice %55 {offsets = [0, 0], sizes = [2, 384], strides = [1, 1]} : vector<2x512xf32> to vector<2x384xf32>
    %57 = arith.negf %56 : vector<2x384xf32>
    %58 = math.exp %57 : vector<2x384xf32>
    %cst_23 = arith.constant 1.000000e+00 : f32
    %59 = vector.broadcast %cst_23 : f32 to vector<2x384xf32>
    %60 = arith.addf %59, %58 : vector<2x384xf32>
    %61 = arith.divf %59, %60 : vector<2x384xf32>
    %62 = vector.extract_strided_slice %61 {offsets = [0, 0], sizes = [2, 128], strides = [1, 1]} : vector<2x384xf32> to vector<2x128xf32>
    %63 = vector.extract_strided_slice %61 {offsets = [0, 128], sizes = [2, 128], strides = [1, 1]} : vector<2x384xf32> to vector<2x128xf32>
    %64 = vector.extract_strided_slice %61 {offsets = [0, 256], sizes = [2, 128], strides = [1, 1]} : vector<2x384xf32> to vector<2x128xf32>
    %65 = vector.extract_strided_slice %55 {offsets = [0, 384], sizes = [2, 128], strides = [1, 1]} : vector<2x512xf32> to vector<2x128xf32>
    %66 = math.tanh %65 : vector<2x128xf32>
    %67 = arith.mulf %46, %62 : vector<2x128xf32>
    %68 = arith.mulf %66, %63 : vector<2x128xf32>
    %69 = arith.addf %67, %68 : vector<2x128xf32>
    %70 = math.tanh %69 : vector<2x128xf32>
    %71 = arith.mulf %70, %64 : vector<2x128xf32>
    %c0_24 = arith.constant 0 : index
    %c2_25 = arith.constant 2 : index
    %c0_26 = arith.constant 0 : index
    %72 = vector.load %arg5[%c0_24, %c2_25, %c0_26] : memref<2x8x128xf32, #tpu.memory_space<vmem>>, vector<2x1x128xf32>
    %73 = vector.shape_cast %72 : vector<2x1x128xf32> to vector<2x128xf32>
    %74 = vector.shape_cast %71 : vector<2x128xf32> to vector<2x1x128xf32>
    tpu.vector_store %arg5[%c0_24, %c2_25, %c0_26], %74 {strides = array<i32>} : memref<2x8x128xf32, #tpu.memory_space<vmem>>, vector<2x1x128xf32>,
    %c0_27 = arith.constant 0 : index
    %c3 = arith.constant 3 : index
    %c0_28 = arith.constant 0 : index
    %75 = vector.load %arg1[%c0_27, %c3, %c0_28] : memref<2x8x512xf32, #tpu.memory_space<vmem>>, vector<2x1x512xf32>
    %76 = vector.shape_cast %75 : vector<2x1x512xf32> to vector<2x512xf32>
    %cst_29 = arith.constant dense<0.000000e+00> : vector<2x512xf32>
    %77 = tpu.matmul %71, %3, %cst_29 {dimension_numbers = #tpu.dot_dimension_numbers<[1], [0], [0], [1], [0, 0, 1, 1], [], []>} : vector<2x128xf32>, vector<128x512xf32>, vector<2x512xf32> -> vector<2x512xf32>
    %78 = arith.addf %76, %77 : vector<2x512xf32>
    %79 = vector.extract_strided_slice %78 {offsets = [0, 0], sizes = [2, 384], strides = [1, 1]} : vector<2x512xf32> to vector<2x384xf32>
    %80 = arith.negf %79 : vector<2x384xf32>
    %81 = math.exp %80 : vector<2x384xf32>
    %cst_30 = arith.constant 1.000000e+00 : f32
    %82 = vector.broadcast %cst_30 : f32 to vector<2x384xf32>
    %83 = arith.addf %82, %81 : vector<2x384xf32>
    %84 = arith.divf %82, %83 : vector<2x384xf32>
    %85 = vector.extract_strided_slice %84 {offsets = [0, 0], sizes = [2, 128], strides = [1, 1]} : vector<2x384xf32> to vector<2x128xf32>
    %86 = vector.extract_strided_slice %84 {offsets = [0, 128], sizes = [2, 128], strides = [1, 1]} : vector<2x384xf32> to vector<2x128xf32>
    %87 = vector.extract_strided_slice %84 {offsets = [0, 256], sizes = [2, 128], strides = [1, 1]} : vector<2x384xf32> to vector<2x128xf32>
    %88 = vector.extract_strided_slice %78 {offsets = [0, 384], sizes = [2, 128], strides = [1, 1]} : vector<2x512xf32> to vector<2x128xf32>
    %89 = math.tanh %88 : vector<2x128xf32>
    %90 = arith.mulf %69, %85 : vector<2x128xf32>
    %91 = arith.mulf %89, %86 : vector<2x128xf32>
    %92 = arith.addf %90, %91 : vector<2x128xf32>
    %93 = math.tanh %92 : vector<2x128xf32>
    %94 = arith.mulf %93, %87 : vector<2x128xf32>
    %c0_31 = arith.constant 0 : index
    %c3_32 = arith.constant 3 : index
    %c0_33 = arith.constant 0 : index
    %95 = vector.load %arg5[%c0_31, %c3_32, %c0_33] : memref<2x8x128xf32, #tpu.memory_space<vmem>>, vector<2x1x128xf32>
    %96 = vector.shape_cast %95 : vector<2x1x128xf32> to vector<2x128xf32>
    %97 = vector.shape_cast %94 : vector<2x128xf32> to vector<2x1x128xf32>
    tpu.vector_store %arg5[%c0_31, %c3_32, %c0_33], %97 {strides = array<i32>} : memref<2x8x128xf32, #tpu.memory_space<vmem>>, vector<2x1x128xf32>,
    %c0_34 = arith.constant 0 : index
    %c4 = arith.constant 4 : index
    %c0_35 = arith.constant 0 : index
    %98 = vector.load %arg1[%c0_34, %c4, %c0_35] : memref<2x8x512xf32, #tpu.memory_space<vmem>>, vector<2x1x512xf32>
    %99 = vector.shape_cast %98 : vector<2x1x512xf32> to vector<2x512xf32>
    %cst_36 = arith.constant dense<0.000000e+00> : vector<2x512xf32>
    %100 = tpu.matmul %94, %3, %cst_36 {dimension_numbers = #tpu.dot_dimension_numbers<[1], [0], [0], [1], [0, 0, 1, 1], [], []>} : vector<2x128xf32>, vector<128x512xf32>, vector<2x512xf32> -> vector<2x512xf32>
    %101 = arith.addf %99, %100 : vector<2x512xf32>
    %102 = vector.extract_strided_slice %101 {offsets = [0, 0], sizes = [2, 384], strides = [1, 1]} : vector<2x512xf32> to vector<2x384xf32>
    %103 = arith.negf %102 : vector<2x384xf32>
    %104 = math.exp %103 : vector<2x384xf32>
    %cst_37 = arith.constant 1.000000e+00 : f32
    %105 = vector.broadcast %cst_37 : f32 to vector<2x384xf32>
    %106 = arith.addf %105, %104 : vector<2x384xf32>
    %107 = arith.divf %105, %106 : vector<2x384xf32>
    %108 = vector.extract_strided_slice %107 {offsets = [0, 0], sizes = [2, 128], strides = [1, 1]} : vector<2x384xf32> to vector<2x128xf32>
    %109 = vector.extract_strided_slice %107 {offsets = [0, 128], sizes = [2, 128], strides = [1, 1]} : vector<2x384xf32> to vector<2x128xf32>
    %110 = vector.extract_strided_slice %107 {offsets = [0, 256], sizes = [2, 128], strides = [1, 1]} : vector<2x384xf32> to vector<2x128xf32>
    %111 = vector.extract_strided_slice %101 {offsets = [0, 384], sizes = [2, 128], strides = [1, 1]} : vector<2x512xf32> to vector<2x128xf32>
    %112 = math.tanh %111 : vector<2x128xf32>
    %113 = arith.mulf %92, %108 : vector<2x128xf32>
    %114 = arith.mulf %112, %109 : vector<2x128xf32>
    %115 = arith.addf %113, %114 : vector<2x128xf32>
    %116 = math.tanh %115 : vector<2x128xf32>
    %117 = arith.mulf %116, %110 : vector<2x128xf32>
    %c0_38 = arith.constant 0 : index
    %c4_39 = arith.constant 4 : index
    %c0_40 = arith.constant 0 : index
    %118 = vector.load %arg5[%c0_38, %c4_39, %c0_40] : memref<2x8x128xf32, #tpu.memory_space<vmem>>, vector<2x1x128xf32>
    %119 = vector.shape_cast %118 : vector<2x1x128xf32> to vector<2x128xf32>
    %120 = vector.shape_cast %117 : vector<2x128xf32> to vector<2x1x128xf32>
    tpu.vector_store %arg5[%c0_38, %c4_39, %c0_40], %120 {strides = array<i32>} : memref<2x8x128xf32, #tpu.memory_space<vmem>>, vector<2x1x128xf32>,
    %c0_41 = arith.constant 0 : index
    %c5 = arith.constant 5 : index
    %c0_42 = arith.constant 0 : index
    %121 = vector.load %arg1[%c0_41, %c5, %c0_42] : memref<2x8x512xf32, #tpu.memory_space<vmem>>, vector<2x1x512xf32>
    %122 = vector.shape_cast %121 : vector<2x1x512xf32> to vector<2x512xf32>
    %cst_43 = arith.constant dense<0.000000e+00> : vector<2x512xf32>
    %123 = tpu.matmul %117, %3, %cst_43 {dimension_numbers = #tpu.dot_dimension_numbers<[1], [0], [0], [1], [0, 0, 1, 1], [], []>} : vector<2x128xf32>, vector<128x512xf32>, vector<2x512xf32> -> vector<2x512xf32>
    %124 = arith.addf %122, %123 : vector<2x512xf32>
    %125 = vector.extract_strided_slice %124 {offsets = [0, 0], sizes = [2, 384], strides = [1, 1]} : vector<2x512xf32> to vector<2x384xf32>
    %126 = arith.negf %125 : vector<2x384xf32>
    %127 = math.exp %126 : vector<2x384xf32>
    %cst_44 = arith.constant 1.000000e+00 : f32
    %128 = vector.broadcast %cst_44 : f32 to vector<2x384xf32>
    %129 = arith.addf %128, %127 : vector<2x384xf32>
    %130 = arith.divf %128, %129 : vector<2x384xf32>
    %131 = vector.extract_strided_slice %130 {offsets = [0, 0], sizes = [2, 128], strides = [1, 1]} : vector<2x384xf32> to vector<2x128xf32>
    %132 = vector.extract_strided_slice %130 {offsets = [0, 128], sizes = [2, 128], strides = [1, 1]} : vector<2x384xf32> to vector<2x128xf32>
    %133 = vector.extract_strided_slice %130 {offsets = [0, 256], sizes = [2, 128], strides = [1, 1]} : vector<2x384xf32> to vector<2x128xf32>
    %134 = vector.extract_strided_slice %124 {offsets = [0, 384], sizes = [2, 128], strides = [1, 1]} : vector<2x512xf32> to vector<2x128xf32>
    %135 = math.tanh %134 : vector<2x128xf32>
    %136 = arith.mulf %115, %131 : vector<2x128xf32>
    %137 = arith.mulf %135, %132 : vector<2x128xf32>
    %138 = arith.addf %136, %137 : vector<2x128xf32>
    %139 = math.tanh %138 : vector<2x128xf32>
    %140 = arith.mulf %139, %133 : vector<2x128xf32>
    %c0_45 = arith.constant 0 : index
    %c5_46 = arith.constant 5 : index
    %c0_47 = arith.constant 0 : index
    %141 = vector.load %arg5[%c0_45, %c5_46, %c0_47] : memref<2x8x128xf32, #tpu.memory_space<vmem>>, vector<2x1x128xf32>
    %142 = vector.shape_cast %141 : vector<2x1x128xf32> to vector<2x128xf32>
    %143 = vector.shape_cast %140 : vector<2x128xf32> to vector<2x1x128xf32>
    tpu.vector_store %arg5[%c0_45, %c5_46, %c0_47], %143 {strides = array<i32>} : memref<2x8x128xf32, #tpu.memory_space<vmem>>, vector<2x1x128xf32>,
    %c0_48 = arith.constant 0 : index
    %c6 = arith.constant 6 : index
    %c0_49 = arith.constant 0 : index
    %144 = vector.load %arg1[%c0_48, %c6, %c0_49] : memref<2x8x512xf32, #tpu.memory_space<vmem>>, vector<2x1x512xf32>
    %145 = vector.shape_cast %144 : vector<2x1x512xf32> to vector<2x512xf32>
    %cst_50 = arith.constant dense<0.000000e+00> : vector<2x512xf32>
    %146 = tpu.matmul %140, %3, %cst_50 {dimension_numbers = #tpu.dot_dimension_numbers<[1], [0], [0], [1], [0, 0, 1, 1], [], []>} : vector<2x128xf32>, vector<128x512xf32>, vector<2x512xf32> -> vector<2x512xf32>
    %147 = arith.addf %145, %146 : vector<2x512xf32>
    %148 = vector.extract_strided_slice %147 {offsets = [0, 0], sizes = [2, 384], strides = [1, 1]} : vector<2x512xf32> to vector<2x384xf32>
    %149 = arith.negf %148 : vector<2x384xf32>
    %150 = math.exp %149 : vector<2x384xf32>
    %cst_51 = arith.constant 1.000000e+00 : f32
    %151 = vector.broadcast %cst_51 : f32 to vector<2x384xf32>
    %152 = arith.addf %151, %150 : vector<2x384xf32>
    %153 = arith.divf %151, %152 : vector<2x384xf32>
    %154 = vector.extract_strided_slice %153 {offsets = [0, 0], sizes = [2, 128], strides = [1, 1]} : vector<2x384xf32> to vector<2x128xf32>
    %155 = vector.extract_strided_slice %153 {offsets = [0, 128], sizes = [2, 128], strides = [1, 1]} : vector<2x384xf32> to vector<2x128xf32>
    %156 = vector.extract_strided_slice %153 {offsets = [0, 256], sizes = [2, 128], strides = [1, 1]} : vector<2x384xf32> to vector<2x128xf32>
    %157 = vector.extract_strided_slice %147 {offsets = [0, 384], sizes = [2, 128], strides = [1, 1]} : vector<2x512xf32> to vector<2x128xf32>
    %158 = math.tanh %157 : vector<2x128xf32>
    %159 = arith.mulf %138, %154 : vector<2x128xf32>
    %160 = arith.mulf %158, %155 : vector<2x128xf32>
    %161 = arith.addf %159, %160 : vector<2x128xf32>
    %162 = math.tanh %161 : vector<2x128xf32>
    %163 = arith.mulf %162, %156 : vector<2x128xf32>
    %c0_52 = arith.constant 0 : index
    %c6_53 = arith.constant 6 : index
    %c0_54 = arith.constant 0 : index
    %164 = vector.load %arg5[%c0_52, %c6_53, %c0_54] : memref<2x8x128xf32, #tpu.memory_space<vmem>>, vector<2x1x128xf32>
    %165 = vector.shape_cast %164 : vector<2x1x128xf32> to vector<2x128xf32>
    %166 = vector.shape_cast %163 : vector<2x128xf32> to vector<2x1x128xf32>
    tpu.vector_store %arg5[%c0_52, %c6_53, %c0_54], %166 {strides = array<i32>} : memref<2x8x128xf32, #tpu.memory_space<vmem>>, vector<2x1x128xf32>,
    %c0_55 = arith.constant 0 : index
    %c7 = arith.constant 7 : index
    %c0_56 = arith.constant 0 : index
    %167 = vector.load %arg1[%c0_55, %c7, %c0_56] : memref<2x8x512xf32, #tpu.memory_space<vmem>>, vector<2x1x512xf32>
    %168 = vector.shape_cast %167 : vector<2x1x512xf32> to vector<2x512xf32>
    %cst_57 = arith.constant dense<0.000000e+00> : vector<2x512xf32>
    %169 = tpu.matmul %163, %3, %cst_57 {dimension_numbers = #tpu.dot_dimension_numbers<[1], [0], [0], [1], [0, 0, 1, 1], [], []>} : vector<2x128xf32>, vector<128x512xf32>, vector<2x512xf32> -> vector<2x512xf32>
    %170 = arith.addf %168, %169 : vector<2x512xf32>
    %171 = vector.extract_strided_slice %170 {offsets = [0, 0], sizes = [2, 384], strides = [1, 1]} : vector<2x512xf32> to vector<2x384xf32>
    %172 = arith.negf %171 : vector<2x384xf32>
    %173 = math.exp %172 : vector<2x384xf32>
    %cst_58 = arith.constant 1.000000e+00 : f32
    %174 = vector.broadcast %cst_58 : f32 to vector<2x384xf32>
    %175 = arith.addf %174, %173 : vector<2x384xf32>
    %176 = arith.divf %174, %175 : vector<2x384xf32>
    %177 = vector.extract_strided_slice %176 {offsets = [0, 0], sizes = [2, 128], strides = [1, 1]} : vector<2x384xf32> to vector<2x128xf32>
    %178 = vector.extract_strided_slice %176 {offsets = [0, 128], sizes = [2, 128], strides = [1, 1]} : vector<2x384xf32> to vector<2x128xf32>
    %179 = vector.extract_strided_slice %176 {offsets = [0, 256], sizes = [2, 128], strides = [1, 1]} : vector<2x384xf32> to vector<2x128xf32>
    %180 = vector.extract_strided_slice %170 {offsets = [0, 384], sizes = [2, 128], strides = [1, 1]} : vector<2x512xf32> to vector<2x128xf32>
    %181 = math.tanh %180 : vector<2x128xf32>
    %182 = arith.mulf %161, %177 : vector<2x128xf32>
    %183 = arith.mulf %181, %178 : vector<2x128xf32>
    %184 = arith.addf %182, %183 : vector<2x128xf32>
    %185 = math.tanh %184 : vector<2x128xf32>
    %186 = arith.mulf %185, %179 : vector<2x128xf32>
    %c0_59 = arith.constant 0 : index
    %c7_60 = arith.constant 7 : index
    %c0_61 = arith.constant 0 : index
    %187 = vector.load %arg5[%c0_59, %c7_60, %c0_61] : memref<2x8x128xf32, #tpu.memory_space<vmem>>, vector<2x1x128xf32>
    %188 = vector.shape_cast %187 : vector<2x1x128xf32> to vector<2x128xf32>
    %189 = vector.shape_cast %186 : vector<2x128xf32> to vector<2x1x128xf32>
    tpu.vector_store %arg5[%c0_59, %c7_60, %c0_61], %189 {strides = array<i32>} : memref<2x8x128xf32, #tpu.memory_space<vmem>>, vector<2x1x128xf32>,
    %c0_62 = arith.constant 0 : index
    %c0_63 = arith.constant 0 : index
    %190 = vector.load %arg6[%c0_62, %c0_63] : memref<2x128xf32, #tpu.memory_space<vmem>>, vector<2x128xf32>
    tpu.vector_store %arg6[%c0_62, %c0_63], %186 {strides = array<i32>} : memref<2x128xf32, #tpu.memory_space<vmem>>, vector<2x128xf32>,
    %c0_64 = arith.constant 0 : index
    %c0_65 = arith.constant 0 : index
    %191 = vector.load %arg7[%c0_64, %c0_65] : memref<2x128xf32, #tpu.memory_space<vmem>>, vector<2x128xf32>
    tpu.vector_store %arg7[%c0_64, %c0_65], %184 {strides = array<i32>} : memref<2x128xf32, #tpu.memory_space<vmem>>, vector<2x128xf32>,
    return
  }
  func.func @transform_0(%arg0: i32) -> (i32, i32, i32) {
    %c0_i32 = arith.constant 0 : i32
    %c0_i32_0 = arith.constant 0 : i32
    %c0_i32_1 = arith.constant 0 : i32
    return %c0_i32, %arg0, %c0_i32_0 : i32, i32, i32
  }
  func.func @transform_1(%arg0: i32) -> (i32, i32) {
    %c0_i32 = arith.constant 0 : i32
    %c0_i32_0 = arith.constant 0 : i32
    %c0_i32_1 = arith.constant 0 : i32
    return %c0_i32, %c0_i32_0 : i32, i32
  }
  func.func @transform_2(%arg0: i32) -> (i32, i32) {
    %c0_i32 = arith.constant 0 : i32
    %c0_i32_0 = arith.constant 0 : i32
    %c0_i32_1 = arith.constant 0 : i32
    return %c0_i32, %c0_i32_0 : i32, i32
  }
  func.func @transform_3(%arg0: i32) -> (i32, i32) {
    %c0_i32 = arith.constant 0 : i32
    %c0_i32_0 = arith.constant 0 : i32
    %c0_i32_1 = arith.constant 0 : i32
    return %c0_i32, %c0_i32_0 : i32, i32
  }
  func.func @transform_4(%arg0: i32) -> (i32, i32, i32) {
    %c0_i32 = arith.constant 0 : i32
    %c0_i32_0 = arith.constant 0 : i32
    %c0_i32_1 = arith.constant 0 : i32
    return %c0_i32, %arg0, %c0_i32_0 : i32, i32, i32
  }
  func.func @transform_5(%arg0: i32) -> (i32, i32) {
    %c0_i32 = arith.constant 0 : i32
    %c0_i32_0 = arith.constant 0 : i32
    %c0_i32_1 = arith.constant 0 : i32
    return %c0_i32, %c0_i32_0 : i32, i32
  }
  func.func @transform_6(%arg0: i32) -> (i32, i32) {
    %c0_i32 = arith.constant 0 : i32
    %c0_i32_0 = arith.constant 0 : i32
    %c0_i32_1 = arith.constant 0 : i32
    return %c0_i32, %c0_i32_0 : i32, i32
  }
}

</mosaic_0001>

<llo_original>
// kernel: lstm_forward.2
$region0: #{lstm_forward.2}
  #allocation0 [shape = 'u32[]', space=smem, size = 0x4, offset = 0x4, fixed_abs, tag = 'smem constant byte address 0x4 - core index']
  #allocation1 [shape = 'u32[144,128]{1,0:T(1,128)}', space=vmem, size = 0x12000, scoped, tag = 'internal scratch']
  %s0 = inlined_call_operand.vmem [shape: f32[16,16], index: 0, kind: input, shape index: {}]
  %s1 = inlined_call_operand.vmem [shape: f32[16,512], index: 1, kind: input, shape index: {}]
  %s2 = inlined_call_operand.vmem [shape: f32[1,512], index: 2, kind: input, shape index: {}]
  %s3 = inlined_call_operand.vmem [shape: f32[16,512], index: 3, kind: output, shape index: {}]
  %s4 = sld [smem:[#allocation0]]
  $region22: #{lstm_forward.2} parent=0
    _
  %s6 = ssub.s32 1, %s4
  %s7 = scalar_select 0, %s6, %s4
  // Predicated region
  $region2: #{lstm_forward.2} parent=0 // pred_check
    _
  $region3: #{lstm_forward.2} parent=0 // pred_check_branch
    %9 = sbr.rel (0) target = $region5
  $region4: #{lstm_forward.2} parent=0 // pred_region
    _
  $region5: #{lstm_forward.2} parent=0 // pred_fallthru
    _
  // Predicated region
  $region6: #{lstm_forward.2} parent=0 // pred_check
    _
  $region7: #{lstm_forward.2} parent=0 // pred_check_branch
    %11 = sbr.rel (0) target = $region9
  $region8: #{lstm_forward.2} parent=0 // pred_region
    _
  $region9: #{lstm_forward.2} parent=0 // pred_fallthru
    _
  // Predicated region
  $region10: #{lstm_forward.2} parent=0 // pred_check
    _
  $region11: #{lstm_forward.2} parent=0 // pred_check_branch
    %13 = sbr.rel (0) target = $region13
  $region12: #{lstm_forward.2} parent=0 // pred_region
    _
  $region13: #{lstm_forward.2} parent=0 // pred_fallthru
    _
  %v14 = vld [vmem:[%s0] sm:$0xff]
  %v15 = vld [vmem:[%s0 + $0x8] sm:$0xff]
  %v16 = vld [vmem:[%s1] sm:$0xff]
  %v17 = vld [vmem:[%s1 + $0x8] sm:$0xff]
  %v18 = vld [vmem:[%s1 + $0x10] sm:$0xff]
  %v19 = vld [vmem:[%s1 + $0x18] sm:$0xff]
  %v20 = vld [vmem:[%s1 + $0x20] sm:$0xff]
  %v21 = vld [vmem:[%s1 + $0x28] sm:$0xff]
  %v22 = vld [vmem:[%s1 + $0x30] sm:$0xff]
  %v23 = vld [vmem:[%s1 + $0x38] sm:$0xff]
  %v24 = vld [vmem:[%s2] sm:$0xf]
  %v26 = vlaneseq
  %v27 = vshrl.u32 %v26, 7
  %v28 = vsub.s32 0, %v27
  %v29 = vrot.slane %v24, %v28
  %v30 = vlaneseq
  %v31 = vshrl.u32 %v30, 7
  %v32 = vsub.s32 1, %v31
  %v33 = vrot.slane %v24, %v32
  %v34 = vlaneseq
  %v35 = vshrl.u32 %v34, 7
  %v36 = vsub.s32 2, %v35
  %v37 = vrot.slane %v24, %v36
  %v38 = vlaneseq
  %v39 = vshrl.u32 %v38, 7
  %v40 = vsub.s32 3, %v39
  %v41 = vrot.slane %v24, %v40
  %vm46 = vcmask 130048
  %v48 = vsel %vm46, %v14, 0
  %v51 = vsel %vm46, %v15, 0
  %53 = vmatprep.subr.mxu0 0.0
  %54 = vmatpush1.msra.mxu0 0.0
  %55 = vmatprep.subr.mxu0 0.0
  %56 = vmatpush1.msra.mxu0 0.0
  %57 = vmatprep.subr.mxu0 0.0
  %58 = vmatpush1.msra.mxu0 0.0
  %59 = vmatprep.subr.mxu0 0.0
  %60 = vmatpush1.msra.mxu0 0.0
  %61 = vmatprep.subr.mxu0 0.0
  %62 = vmatpush1.msra.mxu0 0.0
  %63 = vmatprep.subr.mxu0 0.0
  %64 = vmatpush1.msra.mxu0 0.0
  %65 = vmatprep.subr.mxu0 0.0
  %66 = vmatpush1.msra.mxu0 0.0
  %67 = vmatprep.subr.mxu0 0.0
  %68 = vmatpush1.msra.mxu0 0.0
  %69 = vmatprep.subr.mxu0 0.0
  %70 = vmatpush1.msra.mxu0 0.0
  %71 = vmatprep.subr.mxu0 0.0
  %72 = vmatpush1.msra.mxu0 0.0
  %73 = vmatprep.subr.mxu0 0.0
  %74 = vmatpush1.msra.mxu0 0.0
  %75 = vmatprep.subr.mxu0 0.0
  %76 = vmatpush1.msra.mxu0 0.0
  %77 = vmatprep.subr.mxu0 0.0
  %78 = vmatpush1.msra.mxu0 0.0
  %79 = vmatprep.subr.mxu0 0.0
  %80 = vmatpush1.msra.mxu0 0.0
  %81 = vmatprep.subr.mxu0 %v21
  %82 = vmatpush1.msra.mxu0 %v20
  %83 = vmatprep.subr.mxu0 %v17
  %84 = vmatpush1.msra.mxu0 %v16
  %85 = vmatprep.subr.mxu0 0.0
  %86 = vmatpush2.msra.mxu0 0.0
  %87 = vmatprep.subr.mxu0 0.0
  %88 = vmatpush2.msra.mxu0 0.0
  %89 = vmatprep.subr.mxu0 0.0
  %90 = vmatpush2.msra.mxu0 0.0
  %91 = vmatprep.subr.mxu0 0.0
  %92 = vmatpush2.msra.mxu0 0.0
  %93 = vmatprep.subr.mxu0 0.0
  %94 = vmatpush2.msra.mxu0 0.0
  %95 = vmatprep.subr.mxu0 0.0
  %96 = vmatpush2.msra.mxu0 0.0
  %97 = vmatprep.subr.mxu0 0.0
  %98 = vmatpush2.msra.mxu0 0.0
  %99 = vmatprep.subr.mxu0 0.0
  %100 = vmatpush2.msra.mxu0 0.0
  %101 = vmatprep.subr.mxu0 0.0
  %102 = vmatpush2.msra.mxu0 0.0
  %103 = vmatprep.subr.mxu0 0.0
  %104 = vmatpush2.msra.mxu0 0.0
  %105 = vmatprep.subr.mxu0 0.0
  %106 = vmatpush2.msra.mxu0 0.0
  %107 = vmatprep.subr.mxu0 0.0
  %108 = vmatpush2.msra.mxu0 0.0
  %109 = vmatprep.subr.mxu0 0.0
  %110 = vmatpush2.msra.mxu0 0.0
  %111 = vmatprep.subr.mxu0 0.0
  %112 = vmatpush2.msra.mxu0 0.0
  %113 = vmatprep.subr.mxu0 0.0
  %114 = vmatpush2.msra.mxu0 0.0
  %115 = vmatprep.subr.mxu0 0.0
  %116 = vmatpush2.msra.mxu0 0.0
  %117 = vmatprep.mubr.f32.mxu0 0.0
  %118 = vmatmul.mubr.f32.gmra.mxu0 %v48
  %v119 = vpop.f32.mrf.mxu0
  %v120 = vadd.f32 %v29, %v119
  %v121 = vpop.f32.mrf.mxu0
  %v122 = vadd.f32 %v33, %v121
  %123 = vmatprep.mubr.f32.mxu0 0.0
  %124 = vmatmul.mubr.f32.gmra.mxu0 %v51
  %v125 = vpop.f32.mrf.mxu0
  %v126 = vadd.f32 %v29, %v125
  %v127 = vpop.f32.mrf.mxu0
  %v128 = vadd.f32 %v33, %v127
  %129 = vdwg.mxu0
  %130 = vmatprep.subr.mxu0 0.0
  %131 = vmatpush1.msra.mxu0 0.0
  %132 = vmatprep.subr.mxu0 0.0
  %133 = vmatpush1.msra.mxu0 0.0
  %134 = vmatprep.subr.mxu0 0.0
  %135 = vmatpush1.msra.mxu0 0.0
  %136 = vmatprep.subr.mxu0 0.0
  %137 = vmatpush1.msra.mxu0 0.0
  %138 = vmatprep.subr.mxu0 0.0
  %139 = vmatpush1.msra.mxu0 0.0
  %140 = vmatprep.subr.mxu0 0.0
  %141 = vmatpush1.msra.mxu0 0.0
  %142 = vmatprep.subr.mxu0 0.0
  %143 = vmatpush1.msra.mxu0 0.0
  %144 = vmatprep.subr.mxu0 0.0
  %145 = vmatpush1.msra.mxu0 0.0
  %146 = vmatprep.subr.mxu0 0.0
  %147 = vmatpush1.msra.mxu0 0.0
  %148 = vmatprep.subr.mxu0 0.0
  %149 = vmatpush1.msra.mxu0 0.0
  %150 = vmatprep.subr.mxu0 0.0
  %151 = vmatpush1.msra.mxu0 0.0
  %152 = vmatprep.subr.mxu0 0.0
  %153 = vmatpush1.msra.mxu0 0.0
  %154 = vmatprep.subr.mxu0 0.0
  %155 = vmatpush1.msra.mxu0 0.0
  %156 = vmatprep.subr.mxu0 0.0
  %157 = vmatpush1.msra.mxu0 0.0
  %158 = vmatprep.subr.mxu0 %v23
  %159 = vmatpush1.msra.mxu0 %v22
  %160 = vmatprep.subr.mxu0 %v19
  %161 = vmatpush1.msra.mxu0 %v18
  %162 = vmatprep.subr.mxu0 0.0
  %163 = vmatpush2.msra.mxu0 0.0
  %164 = vmatprep.subr.mxu0 0.0
  %165 = vmatpush2.msra.mxu0 0.0
  %166 = vmatprep.subr.mxu0 0.0
  %167 = vmatpush2.msra.mxu0 0.0
  %168 = vmatprep.subr.mxu0 0.0
  %169 = vmatpush2.msra.mxu0 0.0
  %170 = vmatprep.subr.mxu0 0.0
  %171 = vmatpush2.msra.mxu0 0.0
  %172 = vmatprep.subr.mxu0 0.0
  %173 = vmatpush2.msra.mxu0 0.0
  %174 = vmatprep.subr.mxu0 0.0
  %175 = vmatpush2.msra.mxu0 0.0
  %176 = vmatprep.subr.mxu0 0.0
  %177 = vmatpush2.msra.mxu0 0.0
  %178 = vmatprep.subr.mxu0 0.0
  %179 = vmatpush2.msra.mxu0 0.0
  %180 = vmatprep.subr.mxu0 0.0
  %181 = vmatpush2.msra.mxu0 0.0
  %182 = vmatprep.subr.mxu0 0.0
  %183 = vmatpush2.msra.mxu0 0.0
  %184 = vmatprep.subr.mxu0 0.0
  %185 = vmatpush2.msra.mxu0 0.0
  %186 = vmatprep.subr.mxu0 0.0
  %187 = vmatpush2.msra.mxu0 0.0
  %188 = vmatprep.subr.mxu0 0.0
  %189 = vmatpush2.msra.mxu0 0.0
  %190 = vmatprep.subr.mxu0 0.0
  %191 = vmatpush2.msra.mxu0 0.0
  %192 = vmatprep.subr.mxu0 0.0
  %193 = vmatpush2.msra.mxu0 0.0
  %194 = vmatprep.mubr.f32.mxu0 0.0
  %195 = vmatmul.mubr.f32.gmra.mxu0 %v48
  %v196 = vpop.f32.mrf.mxu0
  %v197 = vadd.f32 %v37, %v196
  %v198 = vpop.f32.mrf.mxu0
  %v199 = vadd.f32 %v41, %v198
  %200 = vmatprep.mubr.f32.mxu0 0.0
  %201 = vmatmul.mubr.f32.gmra.mxu0 %v51
  %v202 = vpop.f32.mrf.mxu0
  %v203 = vadd.f32 %v37, %v202
  %v204 = vpop.f32.mrf.mxu0
  %v205 = vadd.f32 %v41, %v204
  %206 = vdwg.mxu0
  %207 = vst [vmem:[%s3] sm:$0xff] %v120
  %208 = vst [vmem:[%s3 + $0x8] sm:$0xff] %v122
  %209 = vst [vmem:[%s3 + $0x10] sm:$0xff] %v197
  %210 = vst [vmem:[%s3 + $0x18] sm:$0xff] %v199
  %211 = vst [vmem:[%s3 + $0x20] sm:$0xff] %v126
  %212 = vst [vmem:[%s3 + $0x28] sm:$0xff] %v128
  %213 = vst [vmem:[%s3 + $0x30] sm:$0xff] %v203
  %214 = vst [vmem:[%s3 + $0x38] sm:$0xff] %v205
  // Predicated region
  $region14: #{lstm_forward.2} parent=0 // pred_check
    _
  $region15: #{lstm_forward.2} parent=0 // pred_check_branch
    %216 = sbr.rel (0) target = $region17
  $region16: #{lstm_forward.2} parent=0 // pred_region
    _
  $region17: #{lstm_forward.2} parent=0 // pred_fallthru
    _
  // Predicated region
  $region18: #{lstm_forward.2} parent=0 // pred_check
    _
  $region19: #{lstm_forward.2} parent=0 // pred_check_branch
    %218 = sbr.rel (0) target = $region21
  $region20: #{lstm_forward.2} parent=0 // pred_region
    _
  $region21: #{lstm_forward.2} parent=0 // pred_fallthru
    _

// kernel: lstm_forward.3
$region0: #{lstm_forward.3}
  #allocation0 [shape = 'u32[]', space=smem, size = 0x4, offset = 0x4, fixed_abs, tag = 'smem constant byte address 0x4 - core index']
  #allocation1 [shape = 'u32[144,128]{1,0:T(1,128)}', space=vmem, size = 0x12000, scoped, tag = 'internal scratch']
  %s0 = inlined_call_operand.vmem [shape: f32[2,8,512], index: 0, kind: input, shape index: {}]
  %s1 = inlined_call_operand.vmem [shape: f32[2,128], index: 1, kind: input, shape index: {}]
  %s2 = inlined_call_operand.vmem [shape: f32[2,128], index: 2, kind: input, shape index: {}]
  %s3 = inlined_call_operand.vmem [shape: f32[128,512], index: 3, kind: input, shape index: {}]
  %s4 = inlined_call_operand.hbm [shape: f32[2,8,128], index: 4, kind: output, shape index: {0}]
  %s5 = inlined_call_operand.hbm [shape: f32[2,128], index: 5, kind: output, shape index: {1}]
  %s6 = inlined_call_operand.hbm [shape: f32[2,128], index: 6, kind: output, shape index: {2}]
  %7 = xla_tuple %s4, %s5, %s6
  %s8 = sld [smem:[#allocation0]]
  $region46: #{lstm_forward.3} parent=0
    _
  %s10 = ssub.s32 1, %s8
  %s11 = scalar_select 0, %s10, %s8
  $region1: #{lstm_forward.3} parent=0
    #allocation2 [shape = 'u8[8192]{0}', space=vmem, size = 0x2000, scoped, tag = 'output window, operand 0, single buffered']
    #allocation3 [shape = 's32[1]{0}', space=sflag, size = 0x4, scoped, tag = 'scoped memory for lstm_forward.3']
    #allocation4 [shape = 'u8[1024]{0}', space=vmem, size = 0x400, scoped, tag = 'output window, operand 1, single buffered']
    #allocation5 [shape = 's32[1]{0}', space=sflag, size = 0x4, scoped, tag = 'scoped memory for lstm_forward.3']
    #allocation6 [shape = 'u8[1024]{0}', space=vmem, size = 0x400, scoped, tag = 'output window, operand 2, single buffered']
    %12 = vsyncpa [#allocation3], 0
    %13 = vsyncpa [#allocation5], 0
    // Predicated region
    $region2: #{lstm_forward.3} parent=1 // pred_check
      _
    $region3: #{lstm_forward.3} parent=1 // pred_check_branch
      %15 = sbr.rel (0) target = $region5
    $region4: #{lstm_forward.3} parent=1 // pred_region
      _
    $region5: #{lstm_forward.3} parent=1 // pred_fallthru
      _
    // Predicated region
    $region6: #{lstm_forward.3} parent=1 // pred_check
      _
    $region7: #{lstm_forward.3} parent=1 // pred_check_branch
      %17 = sbr.rel (0) target = $region9
    $region8: #{lstm_forward.3} parent=1 // pred_region
      _
    $region9: #{lstm_forward.3} parent=1 // pred_fallthru
      _
    // Predicated region
    $region10: #{lstm_forward.3} parent=1 // pred_check
      _
    $region11: #{lstm_forward.3} parent=1 // pred_check_branch
      %19 = sbr.rel (0) target = $region13
    $region12: #{lstm_forward.3} parent=1 // pred_region
      _
    $region13: #{lstm_forward.3} parent=1 // pred_fallthru
      _
    // Predicated region
    $region14: #{lstm_forward.3} parent=1 // pred_check
      _
    $region15: #{lstm_forward.3} parent=1 // pred_check_branch
      %21 = sbr.rel (0) target = $region17
    $region16: #{lstm_forward.3} parent=1 // pred_region
      _
    $region17: #{lstm_forward.3} parent=1 // pred_fallthru
      _
    %p22 = scmp.eq.s32.totalorder 0, 0
    // Predicated region
    $region18: #{lstm_forward.3} parent=1 // pred_check
      %p23 = pneg %p22
    $region19: #{lstm_forward.3} parent=1 // pred_check_branch
      %25 = sbr.rel (%p23) target = $region21
    $region20: #{lstm_forward.3} parent=1 // pred_region
      %v26 = vld [vmem:[%s1] sm:$0x3]
      %27 = vst [vmem:[#allocation4] sm:$0x3] %v26
      %v28 = vld [vmem:[%s2] sm:$0x3]
      %29 = vst [vmem:[#allocation6] sm:$0x3] %v28
    $region21: #{lstm_forward.3} parent=1 // pred_fallthru
      _
    %v30 = vld [vmem:[%s3] sm:$0xff]
    %v31 = vld [vmem:[%s3 + $0x8] sm:$0xff]
    %v32 = vld [vmem:[%s3 + $0x10] sm:$0xff]
    %v33 = vld [vmem:[%s3 + $0x18] sm:$0xff]
    %v34 = vld [vmem:[%s3 + $0x20] sm:$0xff]
    %v35 = vld [vmem:[%s3 + $0x28] sm:$0xff]
    %v36 = vld [vmem:[%s3 + $0x30] sm:$0xff]
    %v37 = vld [vmem:[%s3 + $0x38] sm:$0xff]
    %v38 = vld [vmem:[%s3 + $0x40] sm:$0xff]
    %v39 = vld [vmem:[%s3 + $0x48] sm:$0xff]
    %v40 = vld [vmem:[%s3 + $0x50] sm:$0xff]
    %v41 = vld [vmem:[%s3 + $0x58] sm:$0xff]
    %v42 = vld [vmem:[%s3 + $0x60] sm:$0xff]
    %v43 = vld [vmem:[%s3 + $0x68] sm:$0xff]
    %v44 = vld [vmem:[%s3 + $0x70] sm:$0xff]
    %v45 = vld [vmem:[%s3 + $0x78] sm:$0xff]
    %v46 = vld [vmem:[%s3 + $0x80] sm:$0xff]
    %v47 = vld [vmem:[%s3 + $0x88] sm:$0xff]
    %v48 = vld [vmem:[%s3 + $0x90] sm:$0xff]
    %v49 = vld [vmem:[%s3 + $0x98] sm:$0xff]
    %v50 = vld [vmem:[%s3 + $0xa0] sm:$0xff]
    %v51 = vld [vmem:[%s3 + $0xa8] sm:$0xff]
    %v52 = vld [vmem:[%s3 + $0xb0] sm:$0xff]
    %v53 = vld [vmem:[%s3 + $0xb8] sm:$0xff]
    %v54 = vld [vmem:[%s3 + $0xc0] sm:$0xff]
    %v55 = vld [vmem:[%s3 + $0xc8] sm:$0xff]
    %v56 = vld [vmem:[%s3 + $0xd0] sm:$0xff]
    %v57 = vld [vmem:[%s3 + $0xd8] sm:$0xff]
    %v58 = vld [vmem:[%s3 + $0xe0] sm:$0xff]
    %v59 = vld [vmem:[%s3 + $0xe8] sm:$0xff]
    %v60 = vld [vmem:[%s3 + $0xf0] sm:$0xff]
    %v61 = vld [vmem:[%s3 + $0xf8] sm:$0xff]
    %v62 = vld [vmem:[%s3 + $0x100] sm:$0xff]
    %v63 = vld [vmem:[%s3 + $0x108] sm:$0xff]
    %v64 = vld [vmem:[%s3 + $0x110] sm:$0xff]
    %v65 = vld [vmem:[%s3 + $0x118] sm:$0xff]
    %v66 = vld [vmem:[%s3 + $0x120] sm:$0xff]
    %v67 = vld [vmem:[%s3 + $0x128] sm:$0xff]
    %v68 = vld [vmem:[%s3 + $0x130] sm:$0xff]
    %v69 = vld [vmem:[%s3 + $0x138] sm:$0xff]
    %v70 = vld [vmem:[%s3 + $0x140] sm:$0xff]
    %v71 = vld [vmem:[%s3 + $0x148] sm:$0xff]
    %v72 = vld [vmem:[%s3 + $0x150] sm:$0xff]
    %v73 = vld [vmem:[%s3 + $0x158] sm:$0xff]
    %v74 = vld [vmem:[%s3 + $0x160] sm:$0xff]
    %v75 = vld [vmem:[%s3 + $0x168] sm:$0xff]
    %v76 = vld [vmem:[%s3 + $0x170] sm:$0xff]
    %v77 = vld [vmem:[%s3 + $0x178] sm:$0xff]
    %v78 = vld [vmem:[%s3 + $0x180] sm:$0xff]
    %v79 = vld [vmem:[%s3 + $0x188] sm:$0xff]
    %v80 = vld [vmem:[%s3 + $0x190] sm:$0xff]
    %v81 = vld [vmem:[%s3 + $0x198] sm:$0xff]
    %v82 = vld [vmem:[%s3 + $0x1a0] sm:$0xff]
    %v83 = vld [vmem:[%s3 + $0x1a8] sm:$0xff]
    %v84 = vld [vmem:[%s3 + $0x1b0] sm:$0xff]
    %v85 = vld [vmem:[%s3 + $0x1b8] sm:$0xff]
    %v86 = vld [vmem:[%s3 + $0x1c0] sm:$0xff]
    %v87 = vld [vmem:[%s3 + $0x1c8] sm:$0xff]
    %v88 = vld [vmem:[%s3 + $0x1d0] sm:$0xff]
    %v89 = vld [vmem:[%s3 + $0x1d8] sm:$0xff]
    %v90 = vld [vmem:[%s3 + $0x1e0] sm:$0xff]
    %v91 = vld [vmem:[%s3 + $0x1e8] sm:$0xff]
    %v92 = vld [vmem:[%s3 + $0x1f0] sm:$0xff]
    %v93 = vld [vmem:[%s3 + $0x1f8] sm:$0xff]
    %v94 = vld [vmem:[#allocation4] sm:$0x3]
    %v95 = vld [vmem:[#allocation6] sm:$0x3]
    %v96 = vld [vmem:[%s0] ss:$8 sm:$0xf]
    %s97 = scalar_lea.vmem %s0, 32
    %v98 = vld [vmem:[%s97] ss:$8 sm:$0xf]
    %99 = vmatprep.subr.mxu0 %v91
    %100 = vmatpush1.msra.mxu0 %v90
    %101 = vmatprep.subr.mxu0 %v87
    %102 = vmatpush1.msra.mxu0 %v86
    %103 = vmatprep.subr.mxu0 %v83
    %104 = vmatpush1.msra.mxu0 %v82
    %105 = vmatprep.subr.mxu0 %v79
    %106 = vmatpush1.msra.mxu0 %v78
    %107 = vmatprep.subr.mxu0 %v75
    %108 = vmatpush1.msra.mxu0 %v74
    %109 = vmatprep.subr.mxu0 %v71
    %110 = vmatpush1.msra.mxu0 %v70
    %111 = vmatprep.subr.mxu0 %v67
    %112 = vmatpush1.msra.mxu0 %v66
    %113 = vmatprep.subr.mxu0 %v63
    %114 = vmatpush1.msra.mxu0 %v62
    %115 = vmatprep.subr.mxu0 %v59
    %116 = vmatpush1.msra.mxu0 %v58
    %117 = vmatprep.subr.mxu0 %v55
    %118 = vmatpush1.msra.mxu0 %v54
    %119 = vmatprep.subr.mxu0 %v51
    %120 = vmatpush1.msra.mxu0 %v50
    %121 = vmatprep.subr.mxu0 %v47
    %122 = vmatpush1.msra.mxu0 %v46
    %123 = vmatprep.subr.mxu0 %v43
    %124 = vmatpush1.msra.mxu0 %v42
    %125 = vmatprep.subr.mxu0 %v39
    %126 = vmatpush1.msra.mxu0 %v38
    %127 = vmatprep.subr.mxu0 %v35
    %128 = vmatpush1.msra.mxu0 %v34
    %129 = vmatprep.subr.mxu0 %v31
    %130 = vmatpush1.msra.mxu0 %v30
    %131 = vmatprep.subr.mxu0 0.0
    %132 = vmatpush2.msra.mxu0 0.0
    %133 = vmatprep.subr.mxu0 0.0
    %134 = vmatpush2.msra.mxu0 0.0
    %135 = vmatprep.subr.mxu0 0.0
    %136 = vmatpush2.msra.mxu0 0.0
    %137 = vmatprep.subr.mxu0 0.0
    %138 = vmatpush2.msra.mxu0 0.0
    %139 = vmatprep.subr.mxu0 0.0
    %140 = vmatpush2.msra.mxu0 0.0
    %141 = vmatprep.subr.mxu0 0.0
    %142 = vmatpush2.msra.mxu0 0.0
    %143 = vmatprep.subr.mxu0 0.0
    %144 = vmatpush2.msra.mxu0 0.0
    %145 = vmatprep.subr.mxu0 0.0
    %146 = vmatpush2.msra.mxu0 0.0
    %147 = vmatprep.subr.mxu0 0.0
    %148 = vmatpush2.msra.mxu0 0.0
    %149 = vmatprep.subr.mxu0 0.0
    %150 = vmatpush2.msra.mxu0 0.0
    %151 = vmatprep.subr.mxu0 0.0
    %152 = vmatpush2.msra.mxu0 0.0
    %153 = vmatprep.subr.mxu0 0.0
    %154 = vmatpush2.msra.mxu0 0.0
    %155 = vmatprep.subr.mxu0 0.0
    %156 = vmatpush2.msra.mxu0 0.0
    %157 = vmatprep.subr.mxu0 0.0
    %158 = vmatpush2.msra.mxu0 0.0
    %159 = vmatprep.subr.mxu0 0.0
    %160 = vmatpush2.msra.mxu0 0.0
    %161 = vmatprep.subr.mxu0 0.0
    %162 = vmatpush2.msra.mxu0 0.0
    %163 = vmatprep.mubr.f32.mxu0 0.0
    %164 = vmatmul.mubr.f32.gmra.mxu0 %v94
    %v165 = vpop.f32.mrf.mxu0
    %v166 = vadd.f32 0.0, %v165
    %v167 = vpop.f32.mrf.mxu0
    %v168 = vadd.f32 0.0, %v167
    %169 = vdwg.mxu0
    %170 = vmatprep.subr.mxu0 %v93
    %171 = vmatpush1.msra.mxu0 %v92
    %172 = vmatprep.subr.mxu0 %v89
    %173 = vmatpush1.msra.mxu0 %v88
    %174 = vmatprep.subr.mxu0 %v85
    %175 = vmatpush1.msra.mxu0 %v84
    %176 = vmatprep.subr.mxu0 %v81
    %177 = vmatpush1.msra.mxu0 %v80
    %178 = vmatprep.subr.mxu0 %v77
    %179 = vmatpush1.msra.mxu0 %v76
    %180 = vmatprep.subr.mxu0 %v73
    %181 = vmatpush1.msra.mxu0 %v72
    %182 = vmatprep.subr.mxu0 %v69
    %183 = vmatpush1.msra.mxu0 %v68
    %184 = vmatprep.subr.mxu0 %v65
    %185 = vmatpush1.msra.mxu0 %v64
    %186 = vmatprep.subr.mxu0 %v61
    %187 = vmatpush1.msra.mxu0 %v60
    %188 = vmatprep.subr.mxu0 %v57
    %189 = vmatpush1.msra.mxu0 %v56
    %190 = vmatprep.subr.mxu0 %v53
    %191 = vmatpush1.msra.mxu0 %v52
    %192 = vmatprep.subr.mxu0 %v49
    %193 = vmatpush1.msra.mxu0 %v48
    %194 = vmatprep.subr.mxu0 %v45
    %195 = vmatpush1.msra.mxu0 %v44
    %196 = vmatprep.subr.mxu0 %v41
    %197 = vmatpush1.msra.mxu0 %v40
    %198 = vmatprep.subr.mxu0 %v37
    %199 = vmatpush1.msra.mxu0 %v36
    %200 = vmatprep.subr.mxu0 %v33
    %201 = vmatpush1.msra.mxu0 %v32
    %202 = vmatprep.subr.mxu0 0.0
    %203 = vmatpush2.msra.mxu0 0.0
    %204 = vmatprep.subr.mxu0 0.0
    %205 = vmatpush2.msra.mxu0 0.0
    %206 = vmatprep.subr.mxu0 0.0
    %207 = vmatpush2.msra.mxu0 0.0
    %208 = vmatprep.subr.mxu0 0.0
    %209 = vmatpush2.msra.mxu0 0.0
    %210 = vmatprep.subr.mxu0 0.0
    %211 = vmatpush2.msra.mxu0 0.0
    %212 = vmatprep.subr.mxu0 0.0
    %213 = vmatpush2.msra.mxu0 0.0
    %214 = vmatprep.subr.mxu0 0.0
    %215 = vmatpush2.msra.mxu0 0.0
    %216 = vmatprep.subr.mxu0 0.0
    %217 = vmatpush2.msra.mxu0 0.0
    %218 = vmatprep.subr.mxu0 0.0
    %219 = vmatpush2.msra.mxu0 0.0
    %220 = vmatprep.subr.mxu0 0.0
    %221 = vmatpush2.msra.mxu0 0.0
    %222 = vmatprep.subr.mxu0 0.0
    %223 = vmatpush2.msra.mxu0 0.0
    %224 = vmatprep.subr.mxu0 0.0
    %225 = vmatpush2.msra.mxu0 0.0
    %226 = vmatprep.subr.mxu0 0.0
    %227 = vmatpush2.msra.mxu0 0.0
    %228 = vmatprep.subr.mxu0 0.0
    %229 = vmatpush2.msra.mxu0 0.0
    %230 = vmatprep.subr.mxu0 0.0
    %231 = vmatpush2.msra.mxu0 0.0
    %232 = vmatprep.subr.mxu0 0.0
    %233 = vmatpush2.msra.mxu0 0.0
    %234 = vmatprep.mubr.f32.mxu0 0.0
    %235 = vmatmul.mubr.f32.gmra.mxu0 %v94
    %v236 = vpop.f32.mrf.mxu0
    %v237 = vadd.f32 0.0, %v236
    %v238 = vpop.f32.mrf.mxu0
    %v239 = vadd.f32 0.0, %v238
    %240 = vdwg.mxu0
    %v245 = vcombine.low %v166, %v168
    %v246 = vcombine.low %v237, %v239
    %v248 = vunpack.c.l.s4 1966171168
    %v249 = vunpack.c.0.s8 %v248
    %v250 = vlaneseq
    %v251 = vshrl.u32 %v250, 7
    %v252 = vsub.s32 %v249, %v251
    %v253 = vrot.slane %v245, %v252
    %v255 = vunpack.c.l.s4 1966171168
    %v256 = vunpack.c.0.s8 %v255
    %v257 = vlaneseq
    %v258 = vshrl.u32 %v257, 7
    %v259 = vsub.s32 %v256, %v258
    %v260 = vrot.slane %v246, %v259
    %v261 = vcombine.low %v253, %v260
    %v262 = vcombine.high %v253, %v260
    %v264 = vunpack.c.l.s4 1966171168
    %v265 = vunpack.c.0.s8 %v264
    %v266 = vlaneseq
    %v267 = vshrl.u32 %v266, 7
    %v268 = vsub.s32 %v265, %v267
    %v269 = vrot.slane %v261, %v268
    %v271 = vunpack.c.l.s4 1966171168
    %v272 = vunpack.c.0.s8 %v271
    %v273 = vlaneseq
    %v274 = vshrl.u32 %v273, 7
    %v275 = vsub.s32 %v272, %v274
    %v276 = vrot.slane %v262, %v275
    %v279 = vadd.f32 %v96, %v269
    %v280 = vadd.f32 %v98, %v276
    %v281 = vxor.u32 %v279, 2147483648
    %v282 = vxor.u32 %v280, 2147483648
    %v283 = vmul.f32 %v281, 1.442695
    %v284 = vpow.pop %v283
    %v285 = vmul.f32 %v282, 1.442695
    %v286 = vpow.pop %v285
    %v287 = vadd.f32 %v284, 1.0
    %v288 = vadd.f32 %v286, 1.0
    %v289 = vrcp.pop %v287
    %v290 = vmul.f32 1.0, %v289
    %v291 = vrcp.pop %v288
    %v292 = vmul.f32 1.0, %v291
    %v295 = vrot.slane %v279, 3
    %v296 = vrot.slane %v280, 3
    %v299 = vtanh.pop %v295
    %v300 = vtanh.pop %v296
    %v303 = vcombine.low %v290, %v292
    %v305 = vunpack.c.l.s4 1966171168
    %v306 = vunpack.c.0.s8 %v305
    %v307 = vlaneseq
    %v308 = vshrl.u32 %v307, 7
    %v309 = vsub.s32 %v306, %v308
    %v310 = vrot.slane %v303, %v309
    %v312 = vunpack.c.l.s4 1966171168
    %v313 = vunpack.c.0.s8 %v312
    %v314 = vlaneseq
    %v315 = vshrl.u32 %v314, 7
    %v316 = vsub.s32 %v313, %v315
    %v317 = vrot.slane %v310, %v316
    %v319 = vmul.f32 %v95, %v317
    %v320 = vrot.slane %v290, 1
    %v321 = vrot.slane %v292, 1
    %v324 = vmul.f32 %v299, %v320
    %v325 = vmul.f32 %v300, %v321
    %v328 = vcombine.low %v324, %v325
    %v330 = vunpack.c.l.s4 1966171168
    %v331 = vunpack.c.0.s8 %v330
    %v332 = vlaneseq
    %v333 = vshrl.u32 %v332, 7
    %v334 = vsub.s32 %v331, %v333
    %v335 = vrot.slane %v328, %v334
    %v337 = vunpack.c.l.s4 1966171168
    %v338 = vunpack.c.0.s8 %v337
    %v339 = vlaneseq
    %v340 = vshrl.u32 %v339, 7
    %v341 = vsub.s32 %v338, %v340
    %v342 = vrot.slane %v335, %v341
    %v344 = vadd.f32 %v319, %v342
    %v345 = vtanh.pop %v344
    %v346 = vcombine.high %v317, %v317
    %v348 = vmul.f32 %v345, %v346
    %v351 = vunpack.c.l.s4 1966171168
    %v352 = vunpack.c.0.s8 %v351
    %v353 = vlaneseq
    %v354 = vshrl.u32 %v353, 7
    %v355 = vsub.s32 %v352, %v354
    %v356 = vrot.slane %v348, %v355
    %v357 = vcombine.high %v356, %v356
    %v359 = vunpack.c.l.s4 1966171168
    %v360 = vunpack.c.0.s8 %v359
    %v361 = vlaneseq
    %v362 = vshrl.u32 %v361, 7
    %v363 = vsub.s32 %v360, %v362
    %v364 = vrot.slane %v356, %v363
    %v366 = vunpack.c.l.s4 1966171168
    %v367 = vunpack.c.0.s8 %v366
    %v368 = vlaneseq
    %v369 = vshrl.u32 %v368, 7
    %v370 = vsub.s32 %v367, %v369
    %v371 = vrot.slane %v357, %v370
    %374 = vst [vmem:[#allocation2] sm:$0x1] %v364
    %375 = vst [vmem:[#allocation2 + $0x8] sm:$0x1] %v371
    %s376 = scalar_lea.vmem %s0, 1
    %v377 = vld [vmem:[%s376] ss:$8 sm:$0xf]
    %s378 = scalar_lea.vmem %s0, 33
    %v379 = vld [vmem:[%s378] ss:$8 sm:$0xf]
    %380 = vmatprep.subr.mxu0 %v91
    %381 = vmatpush1.msra.mxu0 %v90
    %382 = vmatprep.subr.mxu0 %v87
    %383 = vmatpush1.msra.mxu0 %v86
    %384 = vmatprep.subr.mxu0 %v83
    %385 = vmatpush1.msra.mxu0 %v82
    %386 = vmatprep.subr.mxu0 %v79
    %387 = vmatpush1.msra.mxu0 %v78
    %388 = vmatprep.subr.mxu0 %v75
    %389 = vmatpush1.msra.mxu0 %v74
    %390 = vmatprep.subr.mxu0 %v71
    %391 = vmatpush1.msra.mxu0 %v70
    %392 = vmatprep.subr.mxu0 %v67
    %393 = vmatpush1.msra.mxu0 %v66
    %394 = vmatprep.subr.mxu0 %v63
    %395 = vmatpush1.msra.mxu0 %v62
    %396 = vmatprep.subr.mxu0 %v59
    %397 = vmatpush1.msra.mxu0 %v58
    %398 = vmatprep.subr.mxu0 %v55
    %399 = vmatpush1.msra.mxu0 %v54
    %400 = vmatprep.subr.mxu0 %v51
    %401 = vmatpush1.msra.mxu0 %v50
    %402 = vmatprep.subr.mxu0 %v47
    %403 = vmatpush1.msra.mxu0 %v46
    %404 = vmatprep.subr.mxu0 %v43
    %405 = vmatpush1.msra.mxu0 %v42
    %406 = vmatprep.subr.mxu0 %v39
    %407 = vmatpush1.msra.mxu0 %v38
    %408 = vmatprep.subr.mxu0 %v35
    %409 = vmatpush1.msra.mxu0 %v34
    %410 = vmatprep.subr.mxu0 %v31
    %411 = vmatpush1.msra.mxu0 %v30
    %412 = vmatprep.subr.mxu0 0.0
    %413 = vmatpush2.msra.mxu0 0.0
    %414 = vmatprep.subr.mxu0 0.0
    %415 = vmatpush2.msra.mxu0 0.0
    %416 = vmatprep.subr.mxu0 0.0
    %417 = vmatpush2.msra.mxu0 0.0
    %418 = vmatprep.subr.mxu0 0.0
    %419 = vmatpush2.msra.mxu0 0.0
    %420 = vmatprep.subr.mxu0 0.0
    %421 = vmatpush2.msra.mxu0 0.0
    %422 = vmatprep.subr.mxu0 0.0
    %423 = vmatpush2.msra.mxu0 0.0
    %424 = vmatprep.subr.mxu0 0.0
    %425 = vmatpush2.msra.mxu0 0.0
    %426 = vmatprep.subr.mxu0 0.0
    %427 = vmatpush2.msra.mxu0 0.0
    %428 = vmatprep.subr.mxu0 0.0
    %429 = vmatpush2.msra.mxu0 0.0
    %430 = vmatprep.subr.mxu0 0.0
    %431 = vmatpush2.msra.mxu0 0.0
    %432 = vmatprep.subr.mxu0 0.0
    %433 = vmatpush2.msra.mxu0 0.0
    %434 = vmatprep.subr.mxu0 0.0
    %435 = vmatpush2.msra.mxu0 0.0
    %436 = vmatprep.subr.mxu0 0.0
    %437 = vmatpush2.msra.mxu0 0.0
    %438 = vmatprep.subr.mxu0 0.0
    %439 = vmatpush2.msra.mxu0 0.0
    %440 = vmatprep.subr.mxu0 0.0
    %441 = vmatpush2.msra.mxu0 0.0
    %442 = vmatprep.subr.mxu0 0.0
    %443 = vmatpush2.msra.mxu0 0.0
    %444 = vmatprep.mubr.f32.mxu0 0.0
    %445 = vmatmul.mubr.f32.gmra.mxu0 %v348
    %v446 = vpop.f32.mrf.mxu0
    %v447 = vadd.f32 0.0, %v446
    %v448 = vpop.f32.mrf.mxu0
    %v449 = vadd.f32 0.0, %v448
    %450 = vdwg.mxu0
    %451 = vmatprep.subr.mxu0 %v93
    %452 = vmatpush1.msra.mxu0 %v92
    %453 = vmatprep.subr.mxu0 %v89
    %454 = vmatpush1.msra.mxu0 %v88
    %455 = vmatprep.subr.mxu0 %v85
    %456 = vmatpush1.msra.mxu0 %v84
    %457 = vmatprep.subr.mxu0 %v81
    %458 = vmatpush1.msra.mxu0 %v80
    %459 = vmatprep.subr.mxu0 %v77
    %460 = vmatpush1.msra.mxu0 %v76
    %461 = vmatprep.subr.mxu0 %v73
    %462 = vmatpush1.msra.mxu0 %v72
    %463 = vmatprep.subr.mxu0 %v69
    %464 = vmatpush1.msra.mxu0 %v68
    %465 = vmatprep.subr.mxu0 %v65
    %466 = vmatpush1.msra.mxu0 %v64
    %467 = vmatprep.subr.mxu0 %v61
    %468 = vmatpush1.msra.mxu0 %v60
    %469 = vmatprep.subr.mxu0 %v57
    %470 = vmatpush1.msra.mxu0 %v56
    %471 = vmatprep.subr.mxu0 %v53
    %472 = vmatpush1.msra.mxu0 %v52
    %473 = vmatprep.subr.mxu0 %v49
    %474 = vmatpush1.msra.mxu0 %v48
    %475 = vmatprep.subr.mxu0 %v45
    %476 = vmatpush1.msra.mxu0 %v44
    %477 = vmatprep.subr.mxu0 %v41
    %478 = vmatpush1.msra.mxu0 %v40
    %479 = vmatprep.subr.mxu0 %v37
    %480 = vmatpush1.msra.mxu0 %v36
    %481 = vmatprep.subr.mxu0 %v33
    %482 = vmatpush1.msra.mxu0 %v32
    %483 = vmatprep.subr.mxu0 0.0
    %484 = vmatpush2.msra.mxu0 0.0
    %485 = vmatprep.subr.mxu0 0.0
    %486 = vmatpush2.msra.mxu0 0.0
    %487 = vmatprep.subr.mxu0 0.0
    %488 = vmatpush2.msra.mxu0 0.0
    %489 = vmatprep.subr.mxu0 0.0
    %490 = vmatpush2.msra.mxu0 0.0
    %491 = vmatprep.subr.mxu0 0.0
    %492 = vmatpush2.msra.mxu0 0.0
    %493 = vmatprep.subr.mxu0 0.0
    %494 = vmatpush2.msra.mxu0 0.0
    %495 = vmatprep.subr.mxu0 0.0
    %496 = vmatpush2.msra.mxu0 0.0
    %497 = vmatprep.subr.mxu0 0.0
    %498 = vmatpush2.msra.mxu0 0.0
    %499 = vmatprep.subr.mxu0 0.0
    %500 = vmatpush2.msra.mxu0 0.0
    %501 = vmatprep.subr.mxu0 0.0
    %502 = vmatpush2.msra.mxu0 0.0
    %503 = vmatprep.subr.mxu0 0.0
    %504 = vmatpush2.msra.mxu0 0.0
    %505 = vmatprep.subr.mxu0 0.0
    %506 = vmatpush2.msra.mxu0 0.0
    %507 = vmatprep.subr.mxu0 0.0
    %508 = vmatpush2.msra.mxu0 0.0
    %509 = vmatprep.subr.mxu0 0.0
    %510 = vmatpush2.msra.mxu0 0.0
    %511 = vmatprep.subr.mxu0 0.0
    %512 = vmatpush2.msra.mxu0 0.0
    %513 = vmatprep.subr.mxu0 0.0
    %514 = vmatpush2.msra.mxu0 0.0
    %515 = vmatprep.mubr.f32.mxu0 0.0
    %516 = vmatmul.mubr.f32.gmra.mxu0 %v348
    %v517 = vpop.f32.mrf.mxu0
    %v518 = vadd.f32 0.0, %v517
    %v519 = vpop.f32.mrf.mxu0
    %v520 = vadd.f32 0.0, %v519
    %521 = vdwg.mxu0
    %v526 = vcombine.low %v447, %v449
    %v527 = vcombine.low %v518, %v520
    %v529 = vunpack.c.l.s4 1966171168
    %v530 = vunpack.c.0.s8 %v529
    %v531 = vlaneseq
    %v532 = vshrl.u32 %v531, 7
    %v533 = vsub.s32 %v530, %v532
    %v534 = vrot.slane %v526, %v533
    %v536 = vunpack.c.l.s4 1966171168
    %v537 = vunpack.c.0.s8 %v536
    %v538 = vlaneseq
    %v539 = vshrl.u32 %v538, 7
    %v540 = vsub.s32 %v537, %v539
    %v541 = vrot.slane %v527, %v540
    %v542 = vcombine.low %v534, %v541
    %v543 = vcombine.high %v534, %v541
    %v545 = vunpack.c.l.s4 1966171168
    %v546 = vunpack.c.0.s8 %v545
    %v547 = vlaneseq
    %v548 = vshrl.u32 %v547, 7
    %v549 = vsub.s32 %v546, %v548
    %v550 = vrot.slane %v542, %v549
    %v552 = vunpack.c.l.s4 1966171168
    %v553 = vunpack.c.0.s8 %v552
    %v554 = vlaneseq
    %v555 = vshrl.u32 %v554, 7
    %v556 = vsub.s32 %v553, %v555
    %v557 = vrot.slane %v543, %v556
    %v560 = vadd.f32 %v377, %v550
    %v561 = vadd.f32 %v379, %v557
    %v562 = vxor.u32 %v560, 2147483648
    %v563 = vxor.u32 %v561, 2147483648
    %v564 = vmul.f32 %v562, 1.442695
    %v565 = vpow.pop %v564
    %v566 = vmul.f32 %v563, 1.442695
    %v567 = vpow.pop %v566
    %v568 = vadd.f32 %v565, 1.0
    %v569 = vadd.f32 %v567, 1.0
    %v570 = vrcp.pop %v568
    %v571 = vmul.f32 1.0, %v570
    %v572 = vrcp.pop %v569
    %v573 = vmul.f32 1.0, %v572
    %v576 = vrot.slane %v560, 3
    %v577 = vrot.slane %v561, 3
    %v580 = vtanh.pop %v576
    %v581 = vtanh.pop %v577
    %v584 = vcombine.low %v571, %v573
    %v586 = vunpack.c.l.s4 1966171168
    %v587 = vunpack.c.0.s8 %v586
    %v588 = vlaneseq
    %v589 = vshrl.u32 %v588, 7
    %v590 = vsub.s32 %v587, %v589
    %v591 = vrot.slane %v584, %v590
    %v593 = vunpack.c.l.s4 1966171168
    %v594 = vunpack.c.0.s8 %v593
    %v595 = vlaneseq
    %v596 = vshrl.u32 %v595, 7
    %v597 = vsub.s32 %v594, %v596
    %v598 = vrot.slane %v591, %v597
    %v600 = vmul.f32 %v344, %v598
    %v601 = vrot.slane %v571, 1
    %v602 = vrot.slane %v573, 1
    %v605 = vmul.f32 %v580, %v601
    %v606 = vmul.f32 %v581, %v602
    %v609 = vcombine.low %v605, %v606
    %v611 = vunpack.c.l.s4 1966171168
    %v612 = vunpack.c.0.s8 %v611
    %v613 = vlaneseq
    %v614 = vshrl.u32 %v613, 7
    %v615 = vsub.s32 %v612, %v614
    %v616 = vrot.slane %v609, %v615
    %v618 = vunpack.c.l.s4 1966171168
    %v619 = vunpack.c.0.s8 %v618
    %v620 = vlaneseq
    %v621 = vshrl.u32 %v620, 7
    %v622 = vsub.s32 %v619, %v621
    %v623 = vrot.slane %v616, %v622
    %v625 = vadd.f32 %v600, %v623
    %v626 = vtanh.pop %v625
    %v627 = vcombine.high %v598, %v598
    %v629 = vmul.f32 %v626, %v627
    %v632 = vunpack.c.l.s4 1966171168
    %v633 = vunpack.c.0.s8 %v632
    %v634 = vlaneseq
    %v635 = vshrl.u32 %v634, 7
    %v636 = vsub.s32 %v633, %v635
    %v637 = vrot.slane %v629, %v636
    %v638 = vcombine.high %v637, %v637
    %v640 = vunpack.c.l.s4 1966171168
    %v641 = vunpack.c.0.s8 %v640
    %v642 = vlaneseq
    %v643 = vshrl.u32 %v642, 7
    %v644 = vsub.s32 %v641, %v643
    %v645 = vrot.slane %v637, %v644
    %v647 = vunpack.c.l.s4 1966171168
    %v648 = vunpack.c.0.s8 %v647
    %v649 = vlaneseq
    %v650 = vshrl.u32 %v649, 7
    %v651 = vsub.s32 %v648, %v650
    %v652 = vrot.slane %v638, %v651
    %655 = vst [vmem:[#allocation2 + $0x1] sm:$0x1] %v645
    %656 = vst [vmem:[#allocation2 + $0x9] sm:$0x1] %v652
    %s657 = scalar_lea.vmem %s0, 2
    %v658 = vld [vmem:[%s657] ss:$8 sm:$0xf]
    %s659 = scalar_lea.vmem %s0, 34
    %v660 = vld [vmem:[%s659] ss:$8 sm:$0xf]
    %661 = vmatprep.subr.mxu0 %v91
    %662 = vmatpush1.msra.mxu0 %v90
    %663 = vmatprep.subr.mxu0 %v87
    %664 = vmatpush1.msra.mxu0 %v86
    %665 = vmatprep.subr.mxu0 %v83
    %666 = vmatpush1.msra.mxu0 %v82
    %667 = vmatprep.subr.mxu0 %v79
    %668 = vmatpush1.msra.mxu0 %v78
    %669 = vmatprep.subr.mxu0 %v75
    %670 = vmatpush1.msra.mxu0 %v74
    %671 = vmatprep.subr.mxu0 %v71
    %672 = vmatpush1.msra.mxu0 %v70
    %673 = vmatprep.subr.mxu0 %v67
    %674 = vmatpush1.msra.mxu0 %v66
    %675 = vmatprep.subr.mxu0 %v63
    %676 = vmatpush1.msra.mxu0 %v62
    %677 = vmatprep.subr.mxu0 %v59
    %678 = vmatpush1.msra.mxu0 %v58
    %679 = vmatprep.subr.mxu0 %v55
    %680 = vmatpush1.msra.mxu0 %v54
    %681 = vmatprep.subr.mxu0 %v51
    %682 = vmatpush1.msra.mxu0 %v50
    %683 = vmatprep.subr.mxu0 %v47
    %684 = vmatpush1.msra.mxu0 %v46
    %685 = vmatprep.subr.mxu0 %v43
    %686 = vmatpush1.msra.mxu0 %v42
    %687 = vmatprep.subr.mxu0 %v39
    %688 = vmatpush1.msra.mxu0 %v38
    %689 = vmatprep.subr.mxu0 %v35
    %690 = vmatpush1.msra.mxu0 %v34
    %691 = vmatprep.subr.mxu0 %v31
    %692 = vmatpush1.msra.mxu0 %v30
    %693 = vmatprep.subr.mxu0 0.0
    %694 = vmatpush2.msra.mxu0 0.0
    %695 = vmatprep.subr.mxu0 0.0
    %696 = vmatpush2.msra.mxu0 0.0
    %697 = vmatprep.subr.mxu0 0.0
    %698 = vmatpush2.msra.mxu0 0.0
    %699 = vmatprep.subr.mxu0 0.0
    %700 = vmatpush2.msra.mxu0 0.0
    %701 = vmatprep.subr.mxu0 0.0
    %702 = vmatpush2.msra.mxu0 0.0
    %703 = vmatprep.subr.mxu0 0.0
    %704 = vmatpush2.msra.mxu0 0.0
    %705 = vmatprep.subr.mxu0 0.0
    %706 = vmatpush2.msra.mxu0 0.0
    %707 = vmatprep.subr.mxu0 0.0
    %708 = vmatpush2.msra.mxu0 0.0
    %709 = vmatprep.subr.mxu0 0.0
    %710 = vmatpush2.msra.mxu0 0.0
    %711 = vmatprep.subr.mxu0 0.0
    %712 = vmatpush2.msra.mxu0 0.0
    %713 = vmatprep.subr.mxu0 0.0
    %714 = vmatpush2.msra.mxu0 0.0
    %715 = vmatprep.subr.mxu0 0.0
    %716 = vmatpush2.msra.mxu0 0.0
    %717 = vmatprep.subr.mxu0 0.0
    %718 = vmatpush2.msra.mxu0 0.0
    %719 = vmatprep.subr.mxu0 0.0
    %720 = vmatpush2.msra.mxu0 0.0
    %721 = vmatprep.subr.mxu0 0.0
    %722 = vmatpush2.msra.mxu0 0.0
    %723 = vmatprep.subr.mxu0 0.0
    %724 = vmatpush2.msra.mxu0 0.0
    %725 = vmatprep.mubr.f32.mxu0 0.0
    %726 = vmatmul.mubr.f32.gmra.mxu0 %v629
    %v727 = vpop.f32.mrf.mxu0
    %v728 = vadd.f32 0.0, %v727
    %v729 = vpop.f32.mrf.mxu0
    %v730 = vadd.f32 0.0, %v729
    %731 = vdwg.mxu0
    %732 = vmatprep.subr.mxu0 %v93
    %733 = vmatpush1.msra.mxu0 %v92
    %734 = vmatprep.subr.mxu0 %v89
    %735 = vmatpush1.msra.mxu0 %v88
    %736 = vmatprep.subr.mxu0 %v85
    %737 = vmatpush1.msra.mxu0 %v84
    %738 = vmatprep.subr.mxu0 %v81
    %739 = vmatpush1.msra.mxu0 %v80
    %740 = vmatprep.subr.mxu0 %v77
    %741 = vmatpush1.msra.mxu0 %v76
    %742 = vmatprep.subr.mxu0 %v73
    %743 = vmatpush1.msra.mxu0 %v72
    %744 = vmatprep.subr.mxu0 %v69
    %745 = vmatpush1.msra.mxu0 %v68
    %746 = vmatprep.subr.mxu0 %v65
    %747 = vmatpush1.msra.mxu0 %v64
    %748 = vmatprep.subr.mxu0 %v61
    %749 = vmatpush1.msra.mxu0 %v60
    %750 = vmatprep.subr.mxu0 %v57
    %751 = vmatpush1.msra.mxu0 %v56
    %752 = vmatprep.subr.mxu0 %v53
    %753 = vmatpush1.msra.mxu0 %v52
    %754 = vmatprep.subr.mxu0 %v49
    %755 = vmatpush1.msra.mxu0 %v48
    %756 = vmatprep.subr.mxu0 %v45
    %757 = vmatpush1.msra.mxu0 %v44
    %758 = vmatprep.subr.mxu0 %v41
    %759 = vmatpush1.msra.mxu0 %v40
    %760 = vmatprep.subr.mxu0 %v37
    %761 = vmatpush1.msra.mxu0 %v36
    %762 = vmatprep.subr.mxu0 %v33
    %763 = vmatpush1.msra.mxu0 %v32
    %764 = vmatprep.subr.mxu0 0.0
    %765 = vmatpush2.msra.mxu0 0.0
    %766 = vmatprep.subr.mxu0 0.0
    %767 = vmatpush2.msra.mxu0 0.0
    %768 = vmatprep.subr.mxu0 0.0
    %769 = vmatpush2.msra.mxu0 0.0
    %770 = vmatprep.subr.mxu0 0.0
    %771 = vmatpush2.msra.mxu0 0.0
    %772 = vmatprep.subr.mxu0 0.0
    %773 = vmatpush2.msra.mxu0 0.0
    %774 = vmatprep.subr.mxu0 0.0
    %775 = vmatpush2.msra.mxu0 0.0
    %776 = vmatprep.subr.mxu0 0.0
    %777 = vmatpush2.msra.mxu0 0.0
    %778 = vmatprep.subr.mxu0 0.0
    %779 = vmatpush2.msra.mxu0 0.0
    %780 = vmatprep.subr.mxu0 0.0
    %781 = vmatpush2.msra.mxu0 0.0
    %782 = vmatprep.subr.mxu0 0.0
    %783 = vmatpush2.msra.mxu0 0.0
    %784 = vmatprep.subr.mxu0 0.0
    %785 = vmatpush2.msra.mxu0 0.0
    %786 = vmatprep.subr.mxu0 0.0
    %787 = vmatpush2.msra.mxu0 0.0
    %788 = vmatprep.subr.mxu0 0.0
    %789 = vmatpush2.msra.mxu0 0.0
    %790 = vmatprep.subr.mxu0 0.0
    %791 = vmatpush2.msra.mxu0 0.0
    %792 = vmatprep.subr.mxu0 0.0
    %793 = vmatpush2.msra.mxu0 0.0
    %794 = vmatprep.subr.mxu0 0.0
    %795 = vmatpush2.msra.mxu0 0.0
    %796 = vmatprep.mubr.f32.mxu0 0.0
    %797 = vmatmul.mubr.f32.gmra.mxu0 %v629
    %v798 = vpop.f32.mrf.mxu0
    %v799 = vadd.f32 0.0, %v798
    %v800 = vpop.f32.mrf.mxu0
    %v801 = vadd.f32 0.0, %v800
    %802 = vdwg.mxu0
    %v807 = vcombine.low %v728, %v730
    %v808 = vcombine.low %v799, %v801
    %v810 = vunpack.c.l.s4 1966171168
    %v811 = vunpack.c.0.s8 %v810
    %v812 = vlaneseq
    %v813 = vshrl.u32 %v812, 7
    %v814 = vsub.s32 %v811, %v813
    %v815 = vrot.slane %v807, %v814
    %v817 = vunpack.c.l.s4 1966171168
    %v818 = vunpack.c.0.s8 %v817
    %v819 = vlaneseq
    %v820 = vshrl.u32 %v819, 7
    %v821 = vsub.s32 %v818, %v820
    %v822 = vrot.slane %v808, %v821
    %v823 = vcombine.low %v815, %v822
    %v824 = vcombine.high %v815, %v822
    %v826 = vunpack.c.l.s4 1966171168
    %v827 = vunpack.c.0.s8 %v826
    %v828 = vlaneseq
    %v829 = vshrl.u32 %v828, 7
    %v830 = vsub.s32 %v827, %v829
    %v831 = vrot.slane %v823, %v830
    %v833 = vunpack.c.l.s4 1966171168
    %v834 = vunpack.c.0.s8 %v833
    %v835 = vlaneseq
    %v836 = vshrl.u32 %v835, 7
    %v837 = vsub.s32 %v834, %v836
    %v838 = vrot.slane %v824, %v837
    %v841 = vadd.f32 %v658, %v831
    %v842 = vadd.f32 %v660, %v838
    %v843 = vxor.u32 %v841, 2147483648
    %v844 = vxor.u32 %v842, 2147483648
    %v845 = vmul.f32 %v843, 1.442695
    %v846 = vpow.pop %v845
    %v847 = vmul.f32 %v844, 1.442695
    %v848 = vpow.pop %v847
    %v849 = vadd.f32 %v846, 1.0
    %v850 = vadd.f32 %v848, 1.0
    %v851 = vrcp.pop %v849
    %v852 = vmul.f32 1.0, %v851
    %v853 = vrcp.pop %v850
    %v854 = vmul.f32 1.0, %v853
    %v857 = vrot.slane %v841, 3
    %v858 = vrot.slane %v842, 3
    %v861 = vtanh.pop %v857
    %v862 = vtanh.pop %v858
    %v865 = vcombine.low %v852, %v854
    %v867 = vunpack.c.l.s4 1966171168
    %v868 = vunpack.c.0.s8 %v867
    %v869 = vlaneseq
    %v870 = vshrl.u32 %v869, 7
    %v871 = vsub.s32 %v868, %v870
    %v872 = vrot.slane %v865, %v871
    %v874 = vunpack.c.l.s4 1966171168
    %v875 = vunpack.c.0.s8 %v874
    %v876 = vlaneseq
    %v877 = vshrl.u32 %v876, 7
    %v878 = vsub.s32 %v875, %v877
    %v879 = vrot.slane %v872, %v878
    %v881 = vmul.f32 %v625, %v879
    %v882 = vrot.slane %v852, 1
    %v883 = vrot.slane %v854, 1
    %v886 = vmul.f32 %v861, %v882
    %v887 = vmul.f32 %v862, %v883
    %v890 = vcombine.low %v886, %v887
    %v892 = vunpack.c.l.s4 1966171168
    %v893 = vunpack.c.0.s8 %v892
    %v894 = vlaneseq
    %v895 = vshrl.u32 %v894, 7
    %v896 = vsub.s32 %v893, %v895
    %v897 = vrot.slane %v890, %v896
    %v899 = vunpack.c.l.s4 1966171168
    %v900 = vunpack.c.0.s8 %v899
    %v901 = vlaneseq
    %v902 = vshrl.u32 %v901, 7
    %v903 = vsub.s32 %v900, %v902
    %v904 = vrot.slane %v897, %v903
    %v906 = vadd.f32 %v881, %v904
    %v907 = vtanh.pop %v906
    %v908 = vcombine.high %v879, %v879
    %v910 = vmul.f32 %v907, %v908
    %v913 = vunpack.c.l.s4 1966171168
    %v914 = vunpack.c.0.s8 %v913
    %v915 = vlaneseq
    %v916 = vshrl.u32 %v915, 7
    %v917 = vsub.s32 %v914, %v916
    %v918 = vrot.slane %v910, %v917
    %v919 = vcombine.high %v918, %v918
    %v921 = vunpack.c.l.s4 1966171168
    %v922 = vunpack.c.0.s8 %v921
    %v923 = vlaneseq
    %v924 = vshrl.u32 %v923, 7
    %v925 = vsub.s32 %v922, %v924
    %v926 = vrot.slane %v918, %v925
    %v928 = vunpack.c.l.s4 1966171168
    %v929 = vunpack.c.0.s8 %v928
    %v930 = vlaneseq
    %v931 = vshrl.u32 %v930, 7
    %v932 = vsub.s32 %v929, %v931
    %v933 = vrot.slane %v919, %v932
    %936 = vst [vmem:[#allocation2 + $0x2] sm:$0x1] %v926
    %937 = vst [vmem:[#allocation2 + $0xa] sm:$0x1] %v933
    %s938 = scalar_lea.vmem %s0, 3
    %v939 = vld [vmem:[%s938] ss:$8 sm:$0xf]
    %s940 = scalar_lea.vmem %s0, 35
    %v941 = vld [vmem:[%s940] ss:$8 sm:$0xf]
    %942 = vmatprep.subr.mxu0 %v91
    %943 = vmatpush1.msra.mxu0 %v90
    %944 = vmatprep.subr.mxu0 %v87
    %945 = vmatpush1.msra.mxu0 %v86
    %946 = vmatprep.subr.mxu0 %v83
    %947 = vmatpush1.msra.mxu0 %v82
    %948 = vmatprep.subr.mxu0 %v79
    %949 = vmatpush1.msra.mxu0 %v78
    %950 = vmatprep.subr.mxu0 %v75
    %951 = vmatpush1.msra.mxu0 %v74
    %952 = vmatprep.subr.mxu0 %v71
    %953 = vmatpush1.msra.mxu0 %v70
    %954 = vmatprep.subr.mxu0 %v67
    %955 = vmatpush1.msra.mxu0 %v66
    %956 = vmatprep.subr.mxu0 %v63
    %957 = vmatpush1.msra.mxu0 %v62
    %958 = vmatprep.subr.mxu0 %v59
    %959 = vmatpush1.msra.mxu0 %v58
    %960 = vmatprep.subr.mxu0 %v55
    %961 = vmatpush1.msra.mxu0 %v54
    %962 = vmatprep.subr.mxu0 %v51
    %963 = vmatpush1.msra.mxu0 %v50
    %964 = vmatprep.subr.mxu0 %v47
    %965 = vmatpush1.msra.mxu0 %v46
    %966 = vmatprep.subr.mxu0 %v43
    %967 = vmatpush1.msra.mxu0 %v42
    %968 = vmatprep.subr.mxu0 %v39
    %969 = vmatpush1.msra.mxu0 %v38
    %970 = vmatprep.subr.mxu0 %v35
    %971 = vmatpush1.msra.mxu0 %v34
    %972 = vmatprep.subr.mxu0 %v31
    %973 = vmatpush1.msra.mxu0 %v30
    %974 = vmatprep.subr.mxu0 0.0
    %975 = vmatpush2.msra.mxu0 0.0
    %976 = vmatprep.subr.mxu0 0.0
    %977 = vmatpush2.msra.mxu0 0.0
    %978 = vmatprep.subr.mxu0 0.0
    %979 = vmatpush2.msra.mxu0 0.0
    %980 = vmatprep.subr.mxu0 0.0
    %981 = vmatpush2.msra.mxu0 0.0
    %982 = vmatprep.subr.mxu0 0.0
    %983 = vmatpush2.msra.mxu0 0.0
    %984 = vmatprep.subr.mxu0 0.0
    %985 = vmatpush2.msra.mxu0 0.0
    %986 = vmatprep.subr.mxu0 0.0
    %987 = vmatpush2.msra.mxu0 0.0
    %988 = vmatprep.subr.mxu0 0.0
    %989 = vmatpush2.msra.mxu0 0.0
    %990 = vmatprep.subr.mxu0 0.0
    %991 = vmatpush2.msra.mxu0 0.0
    %992 = vmatprep.subr.mxu0 0.0
    %993 = vmatpush2.msra.mxu0 0.0
    %994 = vmatprep.subr.mxu0 0.0
    %995 = vmatpush2.msra.mxu0 0.0
    %996 = vmatprep.subr.mxu0 0.0
    %997 = vmatpush2.msra.mxu0 0.0
    %998 = vmatprep.subr.mxu0 0.0
    %999 = vmatpush2.msra.mxu0 0.0
    %1000 = vmatprep.subr.mxu0 0.0
    %1001 = vmatpush2.msra.mxu0 0.0
    %1002 = vmatprep.subr.mxu0 0.0
    %1003 = vmatpush2.msra.mxu0 0.0
    %1004 = vmatprep.subr.mxu0 0.0
    %1005 = vmatpush2.msra.mxu0 0.0
    %1006 = vmatprep.mubr.f32.mxu0 0.0
    %1007 = vmatmul.mubr.f32.gmra.mxu0 %v910
    %v1008 = vpop.f32.mrf.mxu0
    %v1009 = vadd.f32 0.0, %v1008
    %v1010 = vpop.f32.mrf.mxu0
    %v1011 = vadd.f32 0.0, %v1010
    %1012 = vdwg.mxu0
    %1013 = vmatprep.subr.mxu0 %v93
    %1014 = vmatpush1.msra.mxu0 %v92
    %1015 = vmatprep.subr.mxu0 %v89
    %1016 = vmatpush1.msra.mxu0 %v88
    %1017 = vmatprep.subr.mxu0 %v85
    %1018 = vmatpush1.msra.mxu0 %v84
    %1019 = vmatprep.subr.mxu0 %v81
    %1020 = vmatpush1.msra.mxu0 %v80
    %1021 = vmatprep.subr.mxu0 %v77
    %1022 = vmatpush1.msra.mxu0 %v76
    %1023 = vmatprep.subr.mxu0 %v73
    %1024 = vmatpush1.msra.mxu0 %v72
    %1025 = vmatprep.subr.mxu0 %v69
    %1026 = vmatpush1.msra.mxu0 %v68
    %1027 = vmatprep.subr.mxu0 %v65
    %1028 = vmatpush1.msra.mxu0 %v64
    %1029 = vmatprep.subr.mxu0 %v61
    %1030 = vmatpush1.msra.mxu0 %v60
    %1031 = vmatprep.subr.mxu0 %v57
    %1032 = vmatpush1.msra.mxu0 %v56
    %1033 = vmatprep.subr.mxu0 %v53
    %1034 = vmatpush1.msra.mxu0 %v52
    %1035 = vmatprep.subr.mxu0 %v49
    %1036 = vmatpush1.msra.mxu0 %v48
    %1037 = vmatprep.subr.mxu0 %v45
    %1038 = vmatpush1.msra.mxu0 %v44
    %1039 = vmatprep.subr.mxu0 %v41
    %1040 = vmatpush1.msra.mxu0 %v40
    %1041 = vmatprep.subr.mxu0 %v37
    %1042 = vmatpush1.msra.mxu0 %v36
    %1043 = vmatprep.subr.mxu0 %v33
    %1044 = vmatpush1.msra.mxu0 %v32
    %1045 = vmatprep.subr.mxu0 0.0
    %1046 = vmatpush2.msra.mxu0 0.0
    %1047 = vmatprep.subr.mxu0 0.0
    %1048 = vmatpush2.msra.mxu0 0.0
    %1049 = vmatprep.subr.mxu0 0.0
    %1050 = vmatpush2.msra.mxu0 0.0
    %1051 = vmatprep.subr.mxu0 0.0
    %1052 = vmatpush2.msra.mxu0 0.0
    %1053 = vmatprep.subr.mxu0 0.0
    %1054 = vmatpush2.msra.mxu0 0.0
    %1055 = vmatprep.subr.mxu0 0.0
    %1056 = vmatpush2.msra.mxu0 0.0
    %1057 = vmatprep.subr.mxu0 0.0
    %1058 = vmatpush2.msra.mxu0 0.0
    %1059 = vmatprep.subr.mxu0 0.0
    %1060 = vmatpush2.msra.mxu0 0.0
    %1061 = vmatprep.subr.mxu0 0.0
    %1062 = vmatpush2.msra.mxu0 0.0
    %1063 = vmatprep.subr.mxu0 0.0
    %1064 = vmatpush2.msra.mxu0 0.0
    %1065 = vmatprep.subr.mxu0 0.0
    %1066 = vmatpush2.msra.mxu0 0.0
    %1067 = vmatprep.subr.mxu0 0.0
    %1068 = vmatpush2.msra.mxu0 0.0
    %1069 = vmatprep.subr.mxu0 0.0
    %1070 = vmatpush2.msra.mxu0 0.0
    %1071 = vmatprep.subr.mxu0 0.0
    %1072 = vmatpush2.msra.mxu0 0.0
    %1073 = vmatprep.subr.mxu0 0.0
    %1074 = vmatpush2.msra.mxu0 0.0
    %1075 = vmatprep.subr.mxu0 0.0
    %1076 = vmatpush2.msra.mxu0 0.0
    %1077 = vmatprep.mubr.f32.mxu0 0.0
    %1078 = vmatmul.mubr.f32.gmra.mxu0 %v910
    %v1079 = vpop.f32.mrf.mxu0
    %v1080 = vadd.f32 0.0, %v1079
    %v1081 = vpop.f32.mrf.mxu0
    %v1082 = vadd.f32 0.0, %v1081
    %1083 = vdwg.mxu0
    %v1088 = vcombine.low %v1009, %v1011
    %v1089 = vcombine.low %v1080, %v1082
    %v1091 = vunpack.c.l.s4 1966171168
    %v1092 = vunpack.c.0.s8 %v1091
    %v1093 = vlaneseq
    %v1094 = vshrl.u32 %v1093, 7
    %v1095 = vsub.s32 %v1092, %v1094
    %v1096 = vrot.slane %v1088, %v1095
    %v1098 = vunpack.c.l.s4 1966171168
    %v1099 = vunpack.c.0.s8 %v1098
    %v1100 = vlaneseq
    %v1101 = vshrl.u32 %v1100, 7
    %v1102 = vsub.s32 %v1099, %v1101
    %v1103 = vrot.slane %v1089, %v1102
    %v1104 = vcombine.low %v1096, %v1103
    %v1105 = vcombine.high %v1096, %v1103
    %v1107 = vunpack.c.l.s4 1966171168
    %v1108 = vunpack.c.0.s8 %v1107
    %v1109 = vlaneseq
    %v1110 = vshrl.u32 %v1109, 7
    %v1111 = vsub.s32 %v1108, %v1110
    %v1112 = vrot.slane %v1104, %v1111
    %v1114 = vunpack.c.l.s4 1966171168
    %v1115 = vunpack.c.0.s8 %v1114
    %v1116 = vlaneseq
    %v1117 = vshrl.u32 %v1116, 7
    %v1118 = vsub.s32 %v1115, %v1117
    %v1119 = vrot.slane %v1105, %v1118
    %v1122 = vadd.f32 %v939, %v1112
    %v1123 = vadd.f32 %v941, %v1119
    %v1124 = vxor.u32 %v1122, 2147483648
    %v1125 = vxor.u32 %v1123, 2147483648
    %v1126 = vmul.f32 %v1124, 1.442695
    %v1127 = vpow.pop %v1126
    %v1128 = vmul.f32 %v1125, 1.442695
    %v1129 = vpow.pop %v1128
    %v1130 = vadd.f32 %v1127, 1.0
    %v1131 = vadd.f32 %v1129, 1.0
    %v1132 = vrcp.pop %v1130
    %v1133 = vmul.f32 1.0, %v1132
    %v1134 = vrcp.pop %v1131
    %v1135 = vmul.f32 1.0, %v1134
    %v1138 = vrot.slane %v1122, 3
    %v1139 = vrot.slane %v1123, 3
    %v1142 = vtanh.pop %v1138
    %v1143 = vtanh.pop %v1139
    %v1146 = vcombine.low %v1133, %v1135
    %v1148 = vunpack.c.l.s4 1966171168
    %v1149 = vunpack.c.0.s8 %v1148
    %v1150 = vlaneseq
    %v1151 = vshrl.u32 %v1150, 7
    %v1152 = vsub.s32 %v1149, %v1151
    %v1153 = vrot.slane %v1146, %v1152
    %v1155 = vunpack.c.l.s4 1966171168
    %v1156 = vunpack.c.0.s8 %v1155
    %v1157 = vlaneseq
    %v1158 = vshrl.u32 %v1157, 7
    %v1159 = vsub.s32 %v1156, %v1158
    %v1160 = vrot.slane %v1153, %v1159
    %v1162 = vmul.f32 %v906, %v1160
    %v1163 = vrot.slane %v1133, 1
    %v1164 = vrot.slane %v1135, 1
    %v1167 = vmul.f32 %v1142, %v1163
    %v1168 = vmul.f32 %v1143, %v1164
    %v1171 = vcombine.low %v1167, %v1168
    %v1173 = vunpack.c.l.s4 1966171168
    %v1174 = vunpack.c.0.s8 %v1173
    %v1175 = vlaneseq
    %v1176 = vshrl.u32 %v1175, 7
    %v1177 = vsub.s32 %v1174, %v1176
    %v1178 = vrot.slane %v1171, %v1177
    %v1180 = vunpack.c.l.s4 1966171168
    %v1181 = vunpack.c.0.s8 %v1180
    %v1182 = vlaneseq
    %v1183 = vshrl.u32 %v1182, 7
    %v1184 = vsub.s32 %v1181, %v1183
    %v1185 = vrot.slane %v1178, %v1184
    %v1187 = vadd.f32 %v1162, %v1185
    %v1188 = vtanh.pop %v1187
    %v1189 = vcombine.high %v1160, %v1160
    %v1191 = vmul.f32 %v1188, %v1189
    %v1194 = vunpack.c.l.s4 1966171168
    %v1195 = vunpack.c.0.s8 %v1194
    %v1196 = vlaneseq
    %v1197 = vshrl.u32 %v1196, 7
    %v1198 = vsub.s32 %v1195, %v1197
    %v1199 = vrot.slane %v1191, %v1198
    %v1200 = vcombine.high %v1199, %v1199
    %v1202 = vunpack.c.l.s4 1966171168
    %v1203 = vunpack.c.0.s8 %v1202
    %v1204 = vlaneseq
    %v1205 = vshrl.u32 %v1204, 7
    %v1206 = vsub.s32 %v1203, %v1205
    %v1207 = vrot.slane %v1199, %v1206
    %v1209 = vunpack.c.l.s4 1966171168
    %v1210 = vunpack.c.0.s8 %v1209
    %v1211 = vlaneseq
    %v1212 = vshrl.u32 %v1211, 7
    %v1213 = vsub.s32 %v1210, %v1212
    %v1214 = vrot.slane %v1200, %v1213
    %1217 = vst [vmem:[#allocation2 + $0x3] sm:$0x1] %v1207
    %1218 = vst [vmem:[#allocation2 + $0xb] sm:$0x1] %v1214
    %s1219 = scalar_lea.vmem %s0, 4
    %v1220 = vld [vmem:[%s1219] ss:$8 sm:$0xf]
    %s1221 = scalar_lea.vmem %s0, 36
    %v1222 = vld [vmem:[%s1221] ss:$8 sm:$0xf]
    %1223 = vmatprep.subr.mxu0 %v91
    %1224 = vmatpush1.msra.mxu0 %v90
    %1225 = vmatprep.subr.mxu0 %v87
    %1226 = vmatpush1.msra.mxu0 %v86
    %1227 = vmatprep.subr.mxu0 %v83
    %1228 = vmatpush1.msra.mxu0 %v82
    %1229 = vmatprep.subr.mxu0 %v79
    %1230 = vmatpush1.msra.mxu0 %v78
    %1231 = vmatprep.subr.mxu0 %v75
    %1232 = vmatpush1.msra.mxu0 %v74
    %1233 = vmatprep.subr.mxu0 %v71
    %1234 = vmatpush1.msra.mxu0 %v70
    %1235 = vmatprep.subr.mxu0 %v67
    %1236 = vmatpush1.msra.mxu0 %v66
    %1237 = vmatprep.subr.mxu0 %v63
    %1238 = vmatpush1.msra.mxu0 %v62
    %1239 = vmatprep.subr.mxu0 %v59
    %1240 = vmatpush1.msra.mxu0 %v58
    %1241 = vmatprep.subr.mxu0 %v55
    %1242 = vmatpush1.msra.mxu0 %v54
    %1243 = vmatprep.subr.mxu0 %v51
    %1244 = vmatpush1.msra.mxu0 %v50
    %1245 = vmatprep.subr.mxu0 %v47
    %1246 = vmatpush1.msra.mxu0 %v46
    %1247 = vmatprep.subr.mxu0 %v43
    %1248 = vmatpush1.msra.mxu0 %v42
    %1249 = vmatprep.subr.mxu0 %v39
    %1250 = vmatpush1.msra.mxu0 %v38
    %1251 = vmatprep.subr.mxu0 %v35
    %1252 = vmatpush1.msra.mxu0 %v34
    %1253 = vmatprep.subr.mxu0 %v31
    %1254 = vmatpush1.msra.mxu0 %v30
    %1255 = vmatprep.subr.mxu0 0.0
    %1256 = vmatpush2.msra.mxu0 0.0
    %1257 = vmatprep.subr.mxu0 0.0
    %1258 = vmatpush2.msra.mxu0 0.0
    %1259 = vmatprep.subr.mxu0 0.0
    %1260 = vmatpush2.msra.mxu0 0.0
    %1261 = vmatprep.subr.mxu0 0.0
    %1262 = vmatpush2.msra.mxu0 0.0
    %1263 = vmatprep.subr.mxu0 0.0
    %1264 = vmatpush2.msra.mxu0 0.0
    %1265 = vmatprep.subr.mxu0 0.0
    %1266 = vmatpush2.msra.mxu0 0.0
    %1267 = vmatprep.subr.mxu0 0.0
    %1268 = vmatpush2.msra.mxu0 0.0
    %1269 = vmatprep.subr.mxu0 0.0
    %1270 = vmatpush2.msra.mxu0 0.0
    %1271 = vmatprep.subr.mxu0 0.0
    %1272 = vmatpush2.msra.mxu0 0.0
    %1273 = vmatprep.subr.mxu0 0.0
    %1274 = vmatpush2.msra.mxu0 0.0
    %1275 = vmatprep.subr.mxu0 0.0
    %1276 = vmatpush2.msra.mxu0 0.0
    %1277 = vmatprep.subr.mxu0 0.0
    %1278 = vmatpush2.msra.mxu0 0.0
    %1279 = vmatprep.subr.mxu0 0.0
    %1280 = vmatpush2.msra.mxu0 0.0
    %1281 = vmatprep.subr.mxu0 0.0
    %1282 = vmatpush2.msra.mxu0 0.0
    %1283 = vmatprep.subr.mxu0 0.0
    %1284 = vmatpush2.msra.mxu0 0.0
    %1285 = vmatprep.subr.mxu0 0.0
    %1286 = vmatpush2.msra.mxu0 0.0
    %1287 = vmatprep.mubr.f32.mxu0 0.0
    %1288 = vmatmul.mubr.f32.gmra.mxu0 %v1191
    %v1289 = vpop.f32.mrf.mxu0
    %v1290 = vadd.f32 0.0, %v1289
    %v1291 = vpop.f32.mrf.mxu0
    %v1292 = vadd.f32 0.0, %v1291
    %1293 = vdwg.mxu0
    %1294 = vmatprep.subr.mxu0 %v93
    %1295 = vmatpush1.msra.mxu0 %v92
    %1296 = vmatprep.subr.mxu0 %v89
    %1297 = vmatpush1.msra.mxu0 %v88
    %1298 = vmatprep.subr.mxu0 %v85
    %1299 = vmatpush1.msra.mxu0 %v84
    %1300 = vmatprep.subr.mxu0 %v81
    %1301 = vmatpush1.msra.mxu0 %v80
    %1302 = vmatprep.subr.mxu0 %v77
    %1303 = vmatpush1.msra.mxu0 %v76
    %1304 = vmatprep.subr.mxu0 %v73
    %1305 = vmatpush1.msra.mxu0 %v72
    %1306 = vmatprep.subr.mxu0 %v69
    %1307 = vmatpush1.msra.mxu0 %v68
    %1308 = vmatprep.subr.mxu0 %v65
    %1309 = vmatpush1.msra.mxu0 %v64
    %1310 = vmatprep.subr.mxu0 %v61
    %1311 = vmatpush1.msra.mxu0 %v60
    %1312 = vmatprep.subr.mxu0 %v57
    %1313 = vmatpush1.msra.mxu0 %v56
    %1314 = vmatprep.subr.mxu0 %v53
    %1315 = vmatpush1.msra.mxu0 %v52
    %1316 = vmatprep.subr.mxu0 %v49
    %1317 = vmatpush1.msra.mxu0 %v48
    %1318 = vmatprep.subr.mxu0 %v45
    %1319 = vmatpush1.msra.mxu0 %v44
    %1320 = vmatprep.subr.mxu0 %v41
    %1321 = vmatpush1.msra.mxu0 %v40
    %1322 = vmatprep.subr.mxu0 %v37
    %1323 = vmatpush1.msra.mxu0 %v36
    %1324 = vmatprep.subr.mxu0 %v33
    %1325 = vmatpush1.msra.mxu0 %v32
    %1326 = vmatprep.subr.mxu0 0.0
    %1327 = vmatpush2.msra.mxu0 0.0
    %1328 = vmatprep.subr.mxu0 0.0
    %1329 = vmatpush2.msra.mxu0 0.0
    %1330 = vmatprep.subr.mxu0 0.0
    %1331 = vmatpush2.msra.mxu0 0.0
    %1332 = vmatprep.subr.mxu0 0.0
    %1333 = vmatpush2.msra.mxu0 0.0
    %1334 = vmatprep.subr.mxu0 0.0
    %1335 = vmatpush2.msra.mxu0 0.0
    %1336 = vmatprep.subr.mxu0 0.0
    %1337 = vmatpush2.msra.mxu0 0.0
    %1338 = vmatprep.subr.mxu0 0.0
    %1339 = vmatpush2.msra.mxu0 0.0
    %1340 = vmatprep.subr.mxu0 0.0
    %1341 = vmatpush2.msra.mxu0 0.0
    %1342 = vmatprep.subr.mxu0 0.0
    %1343 = vmatpush2.msra.mxu0 0.0
    %1344 = vmatprep.subr.mxu0 0.0
    %1345 = vmatpush2.msra.mxu0 0.0
    %1346 = vmatprep.subr.mxu0 0.0
    %1347 = vmatpush2.msra.mxu0 0.0
    %1348 = vmatprep.subr.mxu0 0.0
    %1349 = vmatpush2.msra.mxu0 0.0
    %1350 = vmatprep.subr.mxu0 0.0
    %1351 = vmatpush2.msra.mxu0 0.0
    %1352 = vmatprep.subr.mxu0 0.0
    %1353 = vmatpush2.msra.mxu0 0.0
    %1354 = vmatprep.subr.mxu0 0.0
    %1355 = vmatpush2.msra.mxu0 0.0
    %1356 = vmatprep.subr.mxu0 0.0
    %1357 = vmatpush2.msra.mxu0 0.0
    %1358 = vmatprep.mubr.f32.mxu0 0.0
    %1359 = vmatmul.mubr.f32.gmra.mxu0 %v1191
    %v1360 = vpop.f32.mrf.mxu0
    %v1361 = vadd.f32 0.0, %v1360
    %v1362 = vpop.f32.mrf.mxu0
    %v1363 = vadd.f32 0.0, %v1362
    %1364 = vdwg.mxu0
    %v1369 = vcombine.low %v1290, %v1292
    %v1370 = vcombine.low %v1361, %v1363
    %v1372 = vunpack.c.l.s4 1966171168
    %v1373 = vunpack.c.0.s8 %v1372
    %v1374 = vlaneseq
    %v1375 = vshrl.u32 %v1374, 7
    %v1376 = vsub.s32 %v1373, %v1375
    %v1377 = vrot.slane %v1369, %v1376
    %v1379 = vunpack.c.l.s4 1966171168
    %v1380 = vunpack.c.0.s8 %v1379
    %v1381 = vlaneseq
    %v1382 = vshrl.u32 %v1381, 7
    %v1383 = vsub.s32 %v1380, %v1382
    %v1384 = vrot.slane %v1370, %v1383
    %v1385 = vcombine.low %v1377, %v1384
    %v1386 = vcombine.high %v1377, %v1384
    %v1388 = vunpack.c.l.s4 1966171168
    %v1389 = vunpack.c.0.s8 %v1388
    %v1390 = vlaneseq
    %v1391 = vshrl.u32 %v1390, 7
    %v1392 = vsub.s32 %v1389, %v1391
    %v1393 = vrot.slane %v1385, %v1392
    %v1395 = vunpack.c.l.s4 1966171168
    %v1396 = vunpack.c.0.s8 %v1395
    %v1397 = vlaneseq
    %v1398 = vshrl.u32 %v1397, 7
    %v1399 = vsub.s32 %v1396, %v1398
    %v1400 = vrot.slane %v1386, %v1399
    %v1403 = vadd.f32 %v1220, %v1393
    %v1404 = vadd.f32 %v1222, %v1400
    %v1405 = vxor.u32 %v1403, 2147483648
    %v1406 = vxor.u32 %v1404, 2147483648
    %v1407 = vmul.f32 %v1405, 1.442695
    %v1408 = vpow.pop %v1407
    %v1409 = vmul.f32 %v1406, 1.442695
    %v1410 = vpow.pop %v1409
    %v1411 = vadd.f32 %v1408, 1.0
    %v1412 = vadd.f32 %v1410, 1.0
    %v1413 = vrcp.pop %v1411
    %v1414 = vmul.f32 1.0, %v1413
    %v1415 = vrcp.pop %v1412
    %v1416 = vmul.f32 1.0, %v1415
    %v1419 = vrot.slane %v1403, 3
    %v1420 = vrot.slane %v1404, 3
    %v1423 = vtanh.pop %v1419
    %v1424 = vtanh.pop %v1420
    %v1427 = vcombine.low %v1414, %v1416
    %v1429 = vunpack.c.l.s4 1966171168
    %v1430 = vunpack.c.0.s8 %v1429
    %v1431 = vlaneseq
    %v1432 = vshrl.u32 %v1431, 7
    %v1433 = vsub.s32 %v1430, %v1432
    %v1434 = vrot.slane %v1427, %v1433
    %v1436 = vunpack.c.l.s4 1966171168
    %v1437 = vunpack.c.0.s8 %v1436
    %v1438 = vlaneseq
    %v1439 = vshrl.u32 %v1438, 7
    %v1440 = vsub.s32 %v1437, %v1439
    %v1441 = vrot.slane %v1434, %v1440
    %v1443 = vmul.f32 %v1187, %v1441
    %v1444 = vrot.slane %v1414, 1
    %v1445 = vrot.slane %v1416, 1
    %v1448 = vmul.f32 %v1423, %v1444
    %v1449 = vmul.f32 %v1424, %v1445
    %v1452 = vcombine.low %v1448, %v1449
    %v1454 = vunpack.c.l.s4 1966171168
    %v1455 = vunpack.c.0.s8 %v1454
    %v1456 = vlaneseq
    %v1457 = vshrl.u32 %v1456, 7
    %v1458 = vsub.s32 %v1455, %v1457
    %v1459 = vrot.slane %v1452, %v1458
    %v1461 = vunpack.c.l.s4 1966171168
    %v1462 = vunpack.c.0.s8 %v1461
    %v1463 = vlaneseq
    %v1464 = vshrl.u32 %v1463, 7
    %v1465 = vsub.s32 %v1462, %v1464
    %v1466 = vrot.slane %v1459, %v1465
    %v1468 = vadd.f32 %v1443, %v1466
    %v1469 = vtanh.pop %v1468
    %v1470 = vcombine.high %v1441, %v1441
    %v1472 = vmul.f32 %v1469, %v1470
    %v1475 = vunpack.c.l.s4 1966171168
    %v1476 = vunpack.c.0.s8 %v1475
    %v1477 = vlaneseq
    %v1478 = vshrl.u32 %v1477, 7
    %v1479 = vsub.s32 %v1476, %v1478
    %v1480 = vrot.slane %v1472, %v1479
    %v1481 = vcombine.high %v1480, %v1480
    %v1483 = vunpack.c.l.s4 1966171168
    %v1484 = vunpack.c.0.s8 %v1483
    %v1485 = vlaneseq
    %v1486 = vshrl.u32 %v1485, 7
    %v1487 = vsub.s32 %v1484, %v1486
    %v1488 = vrot.slane %v1480, %v1487
    %v1490 = vunpack.c.l.s4 1966171168
    %v1491 = vunpack.c.0.s8 %v1490
    %v1492 = vlaneseq
    %v1493 = vshrl.u32 %v1492, 7
    %v1494 = vsub.s32 %v1491, %v1493
    %v1495 = vrot.slane %v1481, %v1494
    %1498 = vst [vmem:[#allocation2 + $0x4] sm:$0x1] %v1488
    %1499 = vst [vmem:[#allocation2 + $0xc] sm:$0x1] %v1495
    %s1500 = scalar_lea.vmem %s0, 5
    %v1501 = vld [vmem:[%s1500] ss:$8 sm:$0xf]
    %s1502 = scalar_lea.vmem %s0, 37
    %v1503 = vld [vmem:[%s1502] ss:$8 sm:$0xf]
    %1504 = vmatprep.subr.mxu0 %v91
    %1505 = vmatpush1.msra.mxu0 %v90
    %1506 = vmatprep.subr.mxu0 %v87
    %1507 = vmatpush1.msra.mxu0 %v86
    %1508 = vmatprep.subr.mxu0 %v83
    %1509 = vmatpush1.msra.mxu0 %v82
    %1510 = vmatprep.subr.mxu0 %v79
    %1511 = vmatpush1.msra.mxu0 %v78
    %1512 = vmatprep.subr.mxu0 %v75
    %1513 = vmatpush1.msra.mxu0 %v74
    %1514 = vmatprep.subr.mxu0 %v71
    %1515 = vmatpush1.msra.mxu0 %v70
    %1516 = vmatprep.subr.mxu0 %v67
    %1517 = vmatpush1.msra.mxu0 %v66
    %1518 = vmatprep.subr.mxu0 %v63
    %1519 = vmatpush1.msra.mxu0 %v62
    %1520 = vmatprep.subr.mxu0 %v59
    %1521 = vmatpush1.msra.mxu0 %v58
    %1522 = vmatprep.subr.mxu0 %v55
    %1523 = vmatpush1.msra.mxu0 %v54
    %1524 = vmatprep.subr.mxu0 %v51
    %1525 = vmatpush1.msra.mxu0 %v50
    %1526 = vmatprep.subr.mxu0 %v47
    %1527 = vmatpush1.msra.mxu0 %v46
    %1528 = vmatprep.subr.mxu0 %v43
    %1529 = vmatpush1.msra.mxu0 %v42
    %1530 = vmatprep.subr.mxu0 %v39
    %1531 = vmatpush1.msra.mxu0 %v38
    %1532 = vmatprep.subr.mxu0 %v35
    %1533 = vmatpush1.msra.mxu0 %v34
    %1534 = vmatprep.subr.mxu0 %v31
    %1535 = vmatpush1.msra.mxu0 %v30
    %1536 = vmatprep.subr.mxu0 0.0
    %1537 = vmatpush2.msra.mxu0 0.0
    %1538 = vmatprep.subr.mxu0 0.0
    %1539 = vmatpush2.msra.mxu0 0.0
    %1540 = vmatprep.subr.mxu0 0.0
    %1541 = vmatpush2.msra.mxu0 0.0
    %1542 = vmatprep.subr.mxu0 0.0
    %1543 = vmatpush2.msra.mxu0 0.0
    %1544 = vmatprep.subr.mxu0 0.0
    %1545 = vmatpush2.msra.mxu0 0.0
    %1546 = vmatprep.subr.mxu0 0.0
    %1547 = vmatpush2.msra.mxu0 0.0
    %1548 = vmatprep.subr.mxu0 0.0
    %1549 = vmatpush2.msra.mxu0 0.0
    %1550 = vmatprep.subr.mxu0 0.0
    %1551 = vmatpush2.msra.mxu0 0.0
    %1552 = vmatprep.subr.mxu0 0.0
    %1553 = vmatpush2.msra.mxu0 0.0
    %1554 = vmatprep.subr.mxu0 0.0
    %1555 = vmatpush2.msra.mxu0 0.0
    %1556 = vmatprep.subr.mxu0 0.0
    %1557 = vmatpush2.msra.mxu0 0.0
    %1558 = vmatprep.subr.mxu0 0.0
    %1559 = vmatpush2.msra.mxu0 0.0
    %1560 = vmatprep.subr.mxu0 0.0
    %1561 = vmatpush2.msra.mxu0 0.0
    %1562 = vmatprep.subr.mxu0 0.0
    %1563 = vmatpush2.msra.mxu0 0.0
    %1564 = vmatprep.subr.mxu0 0.0
    %1565 = vmatpush2.msra.mxu0 0.0
    %1566 = vmatprep.subr.mxu0 0.0
    %1567 = vmatpush2.msra.mxu0 0.0
    %1568 = vmatprep.mubr.f32.mxu0 0.0
    %1569 = vmatmul.mubr.f32.gmra.mxu0 %v1472
    %v1570 = vpop.f32.mrf.mxu0
    %v1571 = vadd.f32 0.0, %v1570
    %v1572 = vpop.f32.mrf.mxu0
    %v1573 = vadd.f32 0.0, %v1572
    %1574 = vdwg.mxu0
    %1575 = vmatprep.subr.mxu0 %v93
    %1576 = vmatpush1.msra.mxu0 %v92
    %1577 = vmatprep.subr.mxu0 %v89
    %1578 = vmatpush1.msra.mxu0 %v88
    %1579 = vmatprep.subr.mxu0 %v85
    %1580 = vmatpush1.msra.mxu0 %v84
    %1581 = vmatprep.subr.mxu0 %v81
    %1582 = vmatpush1.msra.mxu0 %v80
    %1583 = vmatprep.subr.mxu0 %v77
    %1584 = vmatpush1.msra.mxu0 %v76
    %1585 = vmatprep.subr.mxu0 %v73
    %1586 = vmatpush1.msra.mxu0 %v72
    %1587 = vmatprep.subr.mxu0 %v69
    %1588 = vmatpush1.msra.mxu0 %v68
    %1589 = vmatprep.subr.mxu0 %v65
    %1590 = vmatpush1.msra.mxu0 %v64
    %1591 = vmatprep.subr.mxu0 %v61
    %1592 = vmatpush1.msra.mxu0 %v60
    %1593 = vmatprep.subr.mxu0 %v57
    %1594 = vmatpush1.msra.mxu0 %v56
    %1595 = vmatprep.subr.mxu0 %v53
    %1596 = vmatpush1.msra.mxu0 %v52
    %1597 = vmatprep.subr.mxu0 %v49
    %1598 = vmatpush1.msra.mxu0 %v48
    %1599 = vmatprep.subr.mxu0 %v45
    %1600 = vmatpush1.msra.mxu0 %v44
    %1601 = vmatprep.subr.mxu0 %v41
    %1602 = vmatpush1.msra.mxu0 %v40
    %1603 = vmatprep.subr.mxu0 %v37
    %1604 = vmatpush1.msra.mxu0 %v36
    %1605 = vmatprep.subr.mxu0 %v33
    %1606 = vmatpush1.msra.mxu0 %v32
    %1607 = vmatprep.subr.mxu0 0.0
    %1608 = vmatpush2.msra.mxu0 0.0
    %1609 = vmatprep.subr.mxu0 0.0
    %1610 = vmatpush2.msra.mxu0 0.0
    %1611 = vmatprep.subr.mxu0 0.0
    %1612 = vmatpush2.msra.mxu0 0.0
    %1613 = vmatprep.subr.mxu0 0.0
    %1614 = vmatpush2.msra.mxu0 0.0
    %1615 = vmatprep.subr.mxu0 0.0
    %1616 = vmatpush2.msra.mxu0 0.0
    %1617 = vmatprep.subr.mxu0 0.0
    %1618 = vmatpush2.msra.mxu0 0.0
    %1619 = vmatprep.subr.mxu0 0.0
    %1620 = vmatpush2.msra.mxu0 0.0
    %1621 = vmatprep.subr.mxu0 0.0
    %1622 = vmatpush2.msra.mxu0 0.0
    %1623 = vmatprep.subr.mxu0 0.0
    %1624 = vmatpush2.msra.mxu0 0.0
    %1625 = vmatprep.subr.mxu0 0.0
    %1626 = vmatpush2.msra.mxu0 0.0
    %1627 = vmatprep.subr.mxu0 0.0
    %1628 = vmatpush2.msra.mxu0 0.0
    %1629 = vmatprep.subr.mxu0 0.0
    %1630 = vmatpush2.msra.mxu0 0.0
    %1631 = vmatprep.subr.mxu0 0.0
    %1632 = vmatpush2.msra.mxu0 0.0
    %1633 = vmatprep.subr.mxu0 0.0
    %1634 = vmatpush2.msra.mxu0 0.0
    %1635 = vmatprep.subr.mxu0 0.0
    %1636 = vmatpush2.msra.mxu0 0.0
    %1637 = vmatprep.subr.mxu0 0.0
    %1638 = vmatpush2.msra.mxu0 0.0
    %1639 = vmatprep.mubr.f32.mxu0 0.0
    %1640 = vmatmul.mubr.f32.gmra.mxu0 %v1472
    %v1641 = vpop.f32.mrf.mxu0
    %v1642 = vadd.f32 0.0, %v1641
    %v1643 = vpop.f32.mrf.mxu0
    %v1644 = vadd.f32 0.0, %v1643
    %1645 = vdwg.mxu0
    %v1650 = vcombine.low %v1571, %v1573
    %v1651 = vcombine.low %v1642, %v1644
    %v1653 = vunpack.c.l.s4 1966171168
    %v1654 = vunpack.c.0.s8 %v1653
    %v1655 = vlaneseq
    %v1656 = vshrl.u32 %v1655, 7
    %v1657 = vsub.s32 %v1654, %v1656
    %v1658 = vrot.slane %v1650, %v1657
    %v1660 = vunpack.c.l.s4 1966171168
    %v1661 = vunpack.c.0.s8 %v1660
    %v1662 = vlaneseq
    %v1663 = vshrl.u32 %v1662, 7
    %v1664 = vsub.s32 %v1661, %v1663
    %v1665 = vrot.slane %v1651, %v1664
    %v1666 = vcombine.low %v1658, %v1665
    %v1667 = vcombine.high %v1658, %v1665
    %v1669 = vunpack.c.l.s4 1966171168
    %v1670 = vunpack.c.0.s8 %v1669
    %v1671 = vlaneseq
    %v1672 = vshrl.u32 %v1671, 7
    %v1673 = vsub.s32 %v1670, %v1672
    %v1674 = vrot.slane %v1666, %v1673
    %v1676 = vunpack.c.l.s4 1966171168
    %v1677 = vunpack.c.0.s8 %v1676
    %v1678 = vlaneseq
    %v1679 = vshrl.u32 %v1678, 7
    %v1680 = vsub.s32 %v1677, %v1679
    %v1681 = vrot.slane %v1667, %v1680
    %v1684 = vadd.f32 %v1501, %v1674
    %v1685 = vadd.f32 %v1503, %v1681
    %v1686 = vxor.u32 %v1684, 2147483648
    %v1687 = vxor.u32 %v1685, 2147483648
    %v1688 = vmul.f32 %v1686, 1.442695
    %v1689 = vpow.pop %v1688
    %v1690 = vmul.f32 %v1687, 1.442695
    %v1691 = vpow.pop %v1690
    %v1692 = vadd.f32 %v1689, 1.0
    %v1693 = vadd.f32 %v1691, 1.0
    %v1694 = vrcp.pop %v1692
    %v1695 = vmul.f32 1.0, %v1694
    %v1696 = vrcp.pop %v1693
    %v1697 = vmul.f32 1.0, %v1696
    %v1700 = vrot.slane %v1684, 3
    %v1701 = vrot.slane %v1685, 3
    %v1704 = vtanh.pop %v1700
    %v1705 = vtanh.pop %v1701
    %v1708 = vcombine.low %v1695, %v1697
    %v1710 = vunpack.c.l.s4 1966171168
    %v1711 = vunpack.c.0.s8 %v1710
    %v1712 = vlaneseq
    %v1713 = vshrl.u32 %v1712, 7
    %v1714 = vsub.s32 %v1711, %v1713
    %v1715 = vrot.slane %v1708, %v1714
    %v1717 = vunpack.c.l.s4 1966171168
    %v1718 = vunpack.c.0.s8 %v1717
    %v1719 = vlaneseq
    %v1720 = vshrl.u32 %v1719, 7
    %v1721 = vsub.s32 %v1718, %v1720
    %v1722 = vrot.slane %v1715, %v1721
    %v1724 = vmul.f32 %v1468, %v1722
    %v1725 = vrot.slane %v1695, 1
    %v1726 = vrot.slane %v1697, 1
    %v1729 = vmul.f32 %v1704, %v1725
    %v1730 = vmul.f32 %v1705, %v1726
    %v1733 = vcombine.low %v1729, %v1730
    %v1735 = vunpack.c.l.s4 1966171168
    %v1736 = vunpack.c.0.s8 %v1735
    %v1737 = vlaneseq
    %v1738 = vshrl.u32 %v1737, 7
    %v1739 = vsub.s32 %v1736, %v1738
    %v1740 = vrot.slane %v1733, %v1739
    %v1742 = vunpack.c.l.s4 1966171168
    %v1743 = vunpack.c.0.s8 %v1742
    %v1744 = vlaneseq
    %v1745 = vshrl.u32 %v1744, 7
    %v1746 = vsub.s32 %v1743, %v1745
    %v1747 = vrot.slane %v1740, %v1746
    %v1749 = vadd.f32 %v1724, %v1747
    %v1750 = vtanh.pop %v1749
    %v1751 = vcombine.high %v1722, %v1722
    %v1753 = vmul.f32 %v1750, %v1751
    %v1756 = vunpack.c.l.s4 1966171168
    %v1757 = vunpack.c.0.s8 %v1756
    %v1758 = vlaneseq
    %v1759 = vshrl.u32 %v1758, 7
    %v1760 = vsub.s32 %v1757, %v1759
    %v1761 = vrot.slane %v1753, %v1760
    %v1762 = vcombine.high %v1761, %v1761
    %v1764 = vunpack.c.l.s4 1966171168
    %v1765 = vunpack.c.0.s8 %v1764
    %v1766 = vlaneseq
    %v1767 = vshrl.u32 %v1766, 7
    %v1768 = vsub.s32 %v1765, %v1767
    %v1769 = vrot.slane %v1761, %v1768
    %v1771 = vunpack.c.l.s4 1966171168
    %v1772 = vunpack.c.0.s8 %v1771
    %v1773 = vlaneseq
    %v1774 = vshrl.u32 %v1773, 7
    %v1775 = vsub.s32 %v1772, %v1774
    %v1776 = vrot.slane %v1762, %v1775
    %1779 = vst [vmem:[#allocation2 + $0x5] sm:$0x1] %v1769
    %1780 = vst [vmem:[#allocation2 + $0xd] sm:$0x1] %v1776
    %s1781 = scalar_lea.vmem %s0, 6
    %v1782 = vld [vmem:[%s1781] ss:$8 sm:$0xf]
    %s1783 = scalar_lea.vmem %s0, 38
    %v1784 = vld [vmem:[%s1783] ss:$8 sm:$0xf]
    %1785 = vmatprep.subr.mxu0 %v91
    %1786 = vmatpush1.msra.mxu0 %v90
    %1787 = vmatprep.subr.mxu0 %v87
    %1788 = vmatpush1.msra.mxu0 %v86
    %1789 = vmatprep.subr.mxu0 %v83
    %1790 = vmatpush1.msra.mxu0 %v82
    %1791 = vmatprep.subr.mxu0 %v79
    %1792 = vmatpush1.msra.mxu0 %v78
    %1793 = vmatprep.subr.mxu0 %v75
    %1794 = vmatpush1.msra.mxu0 %v74
    %1795 = vmatprep.subr.mxu0 %v71
    %1796 = vmatpush1.msra.mxu0 %v70
    %1797 = vmatprep.subr.mxu0 %v67
    %1798 = vmatpush1.msra.mxu0 %v66
    %1799 = vmatprep.subr.mxu0 %v63
    %1800 = vmatpush1.msra.mxu0 %v62
    %1801 = vmatprep.subr.mxu0 %v59
    %1802 = vmatpush1.msra.mxu0 %v58
    %1803 = vmatprep.subr.mxu0 %v55
    %1804 = vmatpush1.msra.mxu0 %v54
    %1805 = vmatprep.subr.mxu0 %v51
    %1806 = vmatpush1.msra.mxu0 %v50
    %1807 = vmatprep.subr.mxu0 %v47
    %1808 = vmatpush1.msra.mxu0 %v46
    %1809 = vmatprep.subr.mxu0 %v43
    %1810 = vmatpush1.msra.mxu0 %v42
    %1811 = vmatprep.subr.mxu0 %v39
    %1812 = vmatpush1.msra.mxu0 %v38
    %1813 = vmatprep.subr.mxu0 %v35
    %1814 = vmatpush1.msra.mxu0 %v34
    %1815 = vmatprep.subr.mxu0 %v31
    %1816 = vmatpush1.msra.mxu0 %v30
    %1817 = vmatprep.subr.mxu0 0.0
    %1818 = vmatpush2.msra.mxu0 0.0
    %1819 = vmatprep.subr.mxu0 0.0
    %1820 = vmatpush2.msra.mxu0 0.0
    %1821 = vmatprep.subr.mxu0 0.0
    %1822 = vmatpush2.msra.mxu0 0.0
    %1823 = vmatprep.subr.mxu0 0.0
    %1824 = vmatpush2.msra.mxu0 0.0
    %1825 = vmatprep.subr.mxu0 0.0
    %1826 = vmatpush2.msra.mxu0 0.0
    %1827 = vmatprep.subr.mxu0 0.0
    %1828 = vmatpush2.msra.mxu0 0.0
    %1829 = vmatprep.subr.mxu0 0.0
    %1830 = vmatpush2.msra.mxu0 0.0
    %1831 = vmatprep.subr.mxu0 0.0
    %1832 = vmatpush2.msra.mxu0 0.0
    %1833 = vmatprep.subr.mxu0 0.0
    %1834 = vmatpush2.msra.mxu0 0.0
    %1835 = vmatprep.subr.mxu0 0.0
    %1836 = vmatpush2.msra.mxu0 0.0
    %1837 = vmatprep.subr.mxu0 0.0
    %1838 = vmatpush2.msra.mxu0 0.0
    %1839 = vmatprep.subr.mxu0 0.0
    %1840 = vmatpush2.msra.mxu0 0.0
    %1841 = vmatprep.subr.mxu0 0.0
    %1842 = vmatpush2.msra.mxu0 0.0
    %1843 = vmatprep.subr.mxu0 0.0
    %1844 = vmatpush2.msra.mxu0 0.0
    %1845 = vmatprep.subr.mxu0 0.0
    %1846 = vmatpush2.msra.mxu0 0.0
    %1847 = vmatprep.subr.mxu0 0.0
    %1848 = vmatpush2.msra.mxu0 0.0
    %1849 = vmatprep.mubr.f32.mxu0 0.0
    %1850 = vmatmul.mubr.f32.gmra.mxu0 %v1753
    %v1851 = vpop.f32.mrf.mxu0
    %v1852 = vadd.f32 0.0, %v1851
    %v1853 = vpop.f32.mrf.mxu0
    %v1854 = vadd.f32 0.0, %v1853
    %1855 = vdwg.mxu0
    %1856 = vmatprep.subr.mxu0 %v93
    %1857 = vmatpush1.msra.mxu0 %v92
    %1858 = vmatprep.subr.mxu0 %v89
    %1859 = vmatpush1.msra.mxu0 %v88
    %1860 = vmatprep.subr.mxu0 %v85
    %1861 = vmatpush1.msra.mxu0 %v84
    %1862 = vmatprep.subr.mxu0 %v81
    %1863 = vmatpush1.msra.mxu0 %v80
    %1864 = vmatprep.subr.mxu0 %v77
    %1865 = vmatpush1.msra.mxu0 %v76
    %1866 = vmatprep.subr.mxu0 %v73
    %1867 = vmatpush1.msra.mxu0 %v72
    %1868 = vmatprep.subr.mxu0 %v69
    %1869 = vmatpush1.msra.mxu0 %v68
    %1870 = vmatprep.subr.mxu0 %v65
    %1871 = vmatpush1.msra.mxu0 %v64
    %1872 = vmatprep.subr.mxu0 %v61
    %1873 = vmatpush1.msra.mxu0 %v60
    %1874 = vmatprep.subr.mxu0 %v57
    %1875 = vmatpush1.msra.mxu0 %v56
    %1876 = vmatprep.subr.mxu0 %v53
    %1877 = vmatpush1.msra.mxu0 %v52
    %1878 = vmatprep.subr.mxu0 %v49
    %1879 = vmatpush1.msra.mxu0 %v48
    %1880 = vmatprep.subr.mxu0 %v45
    %1881 = vmatpush1.msra.mxu0 %v44
    %1882 = vmatprep.subr.mxu0 %v41
    %1883 = vmatpush1.msra.mxu0 %v40
    %1884 = vmatprep.subr.mxu0 %v37
    %1885 = vmatpush1.msra.mxu0 %v36
    %1886 = vmatprep.subr.mxu0 %v33
    %1887 = vmatpush1.msra.mxu0 %v32
    %1888 = vmatprep.subr.mxu0 0.0
    %1889 = vmatpush2.msra.mxu0 0.0
    %1890 = vmatprep.subr.mxu0 0.0
    %1891 = vmatpush2.msra.mxu0 0.0
    %1892 = vmatprep.subr.mxu0 0.0
    %1893 = vmatpush2.msra.mxu0 0.0
    %1894 = vmatprep.subr.mxu0 0.0
    %1895 = vmatpush2.msra.mxu0 0.0
    %1896 = vmatprep.subr.mxu0 0.0
    %1897 = vmatpush2.msra.mxu0 0.0
    %1898 = vmatprep.subr.mxu0 0.0
    %1899 = vmatpush2.msra.mxu0 0.0
    %1900 = vmatprep.subr.mxu0 0.0
    %1901 = vmatpush2.msra.mxu0 0.0
    %1902 = vmatprep.subr.mxu0 0.0
    %1903 = vmatpush2.msra.mxu0 0.0
    %1904 = vmatprep.subr.mxu0 0.0
    %1905 = vmatpush2.msra.mxu0 0.0
    %1906 = vmatprep.subr.mxu0 0.0
    %1907 = vmatpush2.msra.mxu0 0.0
    %1908 = vmatprep.subr.mxu0 0.0
    %1909 = vmatpush2.msra.mxu0 0.0
    %1910 = vmatprep.subr.mxu0 0.0
    %1911 = vmatpush2.msra.mxu0 0.0
    %1912 = vmatprep.subr.mxu0 0.0
    %1913 = vmatpush2.msra.mxu0 0.0
    %1914 = vmatprep.subr.mxu0 0.0
    %1915 = vmatpush2.msra.mxu0 0.0
    %1916 = vmatprep.subr.mxu0 0.0
    %1917 = vmatpush2.msra.mxu0 0.0
    %1918 = vmatprep.subr.mxu0 0.0
    %1919 = vmatpush2.msra.mxu0 0.0
    %1920 = vmatprep.mubr.f32.mxu0 0.0
    %1921 = vmatmul.mubr.f32.gmra.mxu0 %v1753
    %v1922 = vpop.f32.mrf.mxu0
    %v1923 = vadd.f32 0.0, %v1922
    %v1924 = vpop.f32.mrf.mxu0
    %v1925 = vadd.f32 0.0, %v1924
    %1926 = vdwg.mxu0
    %v1931 = vcombine.low %v1852, %v1854
    %v1932 = vcombine.low %v1923, %v1925
    %v1934 = vunpack.c.l.s4 1966171168
    %v1935 = vunpack.c.0.s8 %v1934
    %v1936 = vlaneseq
    %v1937 = vshrl.u32 %v1936, 7
    %v1938 = vsub.s32 %v1935, %v1937
    %v1939 = vrot.slane %v1931, %v1938
    %v1941 = vunpack.c.l.s4 1966171168
    %v1942 = vunpack.c.0.s8 %v1941
    %v1943 = vlaneseq
    %v1944 = vshrl.u32 %v1943, 7
    %v1945 = vsub.s32 %v1942, %v1944
    %v1946 = vrot.slane %v1932, %v1945
    %v1947 = vcombine.low %v1939, %v1946
    %v1948 = vcombine.high %v1939, %v1946
    %v1950 = vunpack.c.l.s4 1966171168
    %v1951 = vunpack.c.0.s8 %v1950
    %v1952 = vlaneseq
    %v1953 = vshrl.u32 %v1952, 7
    %v1954 = vsub.s32 %v1951, %v1953
    %v1955 = vrot.slane %v1947, %v1954
    %v1957 = vunpack.c.l.s4 1966171168
    %v1958 = vunpack.c.0.s8 %v1957
    %v1959 = vlaneseq
    %v1960 = vshrl.u32 %v1959, 7
    %v1961 = vsub.s32 %v1958, %v1960
    %v1962 = vrot.slane %v1948, %v1961
    %v1965 = vadd.f32 %v1782, %v1955
    %v1966 = vadd.f32 %v1784, %v1962
    %v1967 = vxor.u32 %v1965, 2147483648
    %v1968 = vxor.u32 %v1966, 2147483648
    %v1969 = vmul.f32 %v1967, 1.442695
    %v1970 = vpow.pop %v1969
    %v1971 = vmul.f32 %v1968, 1.442695
    %v1972 = vpow.pop %v1971
    %v1973 = vadd.f32 %v1970, 1.0
    %v1974 = vadd.f32 %v1972, 1.0
    %v1975 = vrcp.pop %v1973
    %v1976 = vmul.f32 1.0, %v1975
    %v1977 = vrcp.pop %v1974
    %v1978 = vmul.f32 1.0, %v1977
    %v1981 = vrot.slane %v1965, 3
    %v1982 = vrot.slane %v1966, 3
    %v1985 = vtanh.pop %v1981
    %v1986 = vtanh.pop %v1982
    %v1989 = vcombine.low %v1976, %v1978
    %v1991 = vunpack.c.l.s4 1966171168
    %v1992 = vunpack.c.0.s8 %v1991
    %v1993 = vlaneseq
    %v1994 = vshrl.u32 %v1993, 7
    %v1995 = vsub.s32 %v1992, %v1994
    %v1996 = vrot.slane %v1989, %v1995
    %v1998 = vunpack.c.l.s4 1966171168
    %v1999 = vunpack.c.0.s8 %v1998
    %v2000 = vlaneseq
    %v2001 = vshrl.u32 %v2000, 7
    %v2002 = vsub.s32 %v1999, %v2001
    %v2003 = vrot.slane %v1996, %v2002
    %v2005 = vmul.f32 %v1749, %v2003
    %v2006 = vrot.slane %v1976, 1
    %v2007 = vrot.slane %v1978, 1
    %v2010 = vmul.f32 %v1985, %v2006
    %v2011 = vmul.f32 %v1986, %v2007
    %v2014 = vcombine.low %v2010, %v2011
    %v2016 = vunpack.c.l.s4 1966171168
    %v2017 = vunpack.c.0.s8 %v2016
    %v2018 = vlaneseq
    %v2019 = vshrl.u32 %v2018, 7
    %v2020 = vsub.s32 %v2017, %v2019
    %v2021 = vrot.slane %v2014, %v2020
    %v2023 = vunpack.c.l.s4 1966171168
    %v2024 = vunpack.c.0.s8 %v2023
    %v2025 = vlaneseq
    %v2026 = vshrl.u32 %v2025, 7
    %v2027 = vsub.s32 %v2024, %v2026
    %v2028 = vrot.slane %v2021, %v2027
    %v2030 = vadd.f32 %v2005, %v2028
    %v2031 = vtanh.pop %v2030
    %v2032 = vcombine.high %v2003, %v2003
    %v2034 = vmul.f32 %v2031, %v2032
    %v2037 = vunpack.c.l.s4 1966171168
    %v2038 = vunpack.c.0.s8 %v2037
    %v2039 = vlaneseq
    %v2040 = vshrl.u32 %v2039, 7
    %v2041 = vsub.s32 %v2038, %v2040
    %v2042 = vrot.slane %v2034, %v2041
    %v2043 = vcombine.high %v2042, %v2042
    %v2045 = vunpack.c.l.s4 1966171168
    %v2046 = vunpack.c.0.s8 %v2045
    %v2047 = vlaneseq
    %v2048 = vshrl.u32 %v2047, 7
    %v2049 = vsub.s32 %v2046, %v2048
    %v2050 = vrot.slane %v2042, %v2049
    %v2052 = vunpack.c.l.s4 1966171168
    %v2053 = vunpack.c.0.s8 %v2052
    %v2054 = vlaneseq
    %v2055 = vshrl.u32 %v2054, 7
    %v2056 = vsub.s32 %v2053, %v2055
    %v2057 = vrot.slane %v2043, %v2056
    %2060 = vst [vmem:[#allocation2 + $0x6] sm:$0x1] %v2050
    %2061 = vst [vmem:[#allocation2 + $0xe] sm:$0x1] %v2057
    %s2062 = scalar_lea.vmem %s0, 7
    %v2063 = vld [vmem:[%s2062] ss:$8 sm:$0xf]
    %s2064 = scalar_lea.vmem %s0, 39
    %v2065 = vld [vmem:[%s2064] ss:$8 sm:$0xf]
    %2066 = vmatprep.subr.mxu0 %v91
    %2067 = vmatpush1.msra.mxu0 %v90
    %2068 = vmatprep.subr.mxu0 %v87
    %2069 = vmatpush1.msra.mxu0 %v86
    %2070 = vmatprep.subr.mxu0 %v83
    %2071 = vmatpush1.msra.mxu0 %v82
    %2072 = vmatprep.subr.mxu0 %v79
    %2073 = vmatpush1.msra.mxu0 %v78
    %2074 = vmatprep.subr.mxu0 %v75
    %2075 = vmatpush1.msra.mxu0 %v74
    %2076 = vmatprep.subr.mxu0 %v71
    %2077 = vmatpush1.msra.mxu0 %v70
    %2078 = vmatprep.subr.mxu0 %v67
    %2079 = vmatpush1.msra.mxu0 %v66
    %2080 = vmatprep.subr.mxu0 %v63
    %2081 = vmatpush1.msra.mxu0 %v62
    %2082 = vmatprep.subr.mxu0 %v59
    %2083 = vmatpush1.msra.mxu0 %v58
    %2084 = vmatprep.subr.mxu0 %v55
    %2085 = vmatpush1.msra.mxu0 %v54
    %2086 = vmatprep.subr.mxu0 %v51
    %2087 = vmatpush1.msra.mxu0 %v50
    %2088 = vmatprep.subr.mxu0 %v47
    %2089 = vmatpush1.msra.mxu0 %v46
    %2090 = vmatprep.subr.mxu0 %v43
    %2091 = vmatpush1.msra.mxu0 %v42
    %2092 = vmatprep.subr.mxu0 %v39
    %2093 = vmatpush1.msra.mxu0 %v38
    %2094 = vmatprep.subr.mxu0 %v35
    %2095 = vmatpush1.msra.mxu0 %v34
    %2096 = vmatprep.subr.mxu0 %v31
    %2097 = vmatpush1.msra.mxu0 %v30
    %2098 = vmatprep.subr.mxu0 0.0
    %2099 = vmatpush2.msra.mxu0 0.0
    %2100 = vmatprep.subr.mxu0 0.0
    %2101 = vmatpush2.msra.mxu0 0.0
    %2102 = vmatprep.subr.mxu0 0.0
    %2103 = vmatpush2.msra.mxu0 0.0
    %2104 = vmatprep.subr.mxu0 0.0
    %2105 = vmatpush2.msra.mxu0 0.0
    %2106 = vmatprep.subr.mxu0 0.0
    %2107 = vmatpush2.msra.mxu0 0.0
    %2108 = vmatprep.subr.mxu0 0.0
    %2109 = vmatpush2.msra.mxu0 0.0
    %2110 = vmatprep.subr.mxu0 0.0
    %2111 = vmatpush2.msra.mxu0 0.0
    %2112 = vmatprep.subr.mxu0 0.0
    %2113 = vmatpush2.msra.mxu0 0.0
    %2114 = vmatprep.subr.mxu0 0.0
    %2115 = vmatpush2.msra.mxu0 0.0
    %2116 = vmatprep.subr.mxu0 0.0
    %2117 = vmatpush2.msra.mxu0 0.0
    %2118 = vmatprep.subr.mxu0 0.0
    %2119 = vmatpush2.msra.mxu0 0.0
    %2120 = vmatprep.subr.mxu0 0.0
    %2121 = vmatpush2.msra.mxu0 0.0
    %2122 = vmatprep.subr.mxu0 0.0
    %2123 = vmatpush2.msra.mxu0 0.0
    %2124 = vmatprep.subr.mxu0 0.0
    %2125 = vmatpush2.msra.mxu0 0.0
    %2126 = vmatprep.subr.mxu0 0.0
    %2127 = vmatpush2.msra.mxu0 0.0
    %2128 = vmatprep.subr.mxu0 0.0
    %2129 = vmatpush2.msra.mxu0 0.0
    %2130 = vmatprep.mubr.f32.mxu0 0.0
    %2131 = vmatmul.mubr.f32.gmra.mxu0 %v2034
    %v2132 = vpop.f32.mrf.mxu0
    %v2133 = vadd.f32 0.0, %v2132
    %v2134 = vpop.f32.mrf.mxu0
    %v2135 = vadd.f32 0.0, %v2134
    %2136 = vdwg.mxu0
    %2137 = vmatprep.subr.mxu0 %v93
    %2138 = vmatpush1.msra.mxu0 %v92
    %2139 = vmatprep.subr.mxu0 %v89
    %2140 = vmatpush1.msra.mxu0 %v88
    %2141 = vmatprep.subr.mxu0 %v85
    %2142 = vmatpush1.msra.mxu0 %v84
    %2143 = vmatprep.subr.mxu0 %v81
    %2144 = vmatpush1.msra.mxu0 %v80
    %2145 = vmatprep.subr.mxu0 %v77
    %2146 = vmatpush1.msra.mxu0 %v76
    %2147 = vmatprep.subr.mxu0 %v73
    %2148 = vmatpush1.msra.mxu0 %v72
    %2149 = vmatprep.subr.mxu0 %v69
    %2150 = vmatpush1.msra.mxu0 %v68
    %2151 = vmatprep.subr.mxu0 %v65
    %2152 = vmatpush1.msra.mxu0 %v64
    %2153 = vmatprep.subr.mxu0 %v61
    %2154 = vmatpush1.msra.mxu0 %v60
    %2155 = vmatprep.subr.mxu0 %v57
    %2156 = vmatpush1.msra.mxu0 %v56
    %2157 = vmatprep.subr.mxu0 %v53
    %2158 = vmatpush1.msra.mxu0 %v52
    %2159 = vmatprep.subr.mxu0 %v49
    %2160 = vmatpush1.msra.mxu0 %v48
    %2161 = vmatprep.subr.mxu0 %v45
    %2162 = vmatpush1.msra.mxu0 %v44
    %2163 = vmatprep.subr.mxu0 %v41
    %2164 = vmatpush1.msra.mxu0 %v40
    %2165 = vmatprep.subr.mxu0 %v37
    %2166 = vmatpush1.msra.mxu0 %v36
    %2167 = vmatprep.subr.mxu0 %v33
    %2168 = vmatpush1.msra.mxu0 %v32
    %2169 = vmatprep.subr.mxu0 0.0
    %2170 = vmatpush2.msra.mxu0 0.0
    %2171 = vmatprep.subr.mxu0 0.0
    %2172 = vmatpush2.msra.mxu0 0.0
    %2173 = vmatprep.subr.mxu0 0.0
    %2174 = vmatpush2.msra.mxu0 0.0
    %2175 = vmatprep.subr.mxu0 0.0
    %2176 = vmatpush2.msra.mxu0 0.0
    %2177 = vmatprep.subr.mxu0 0.0
    %2178 = vmatpush2.msra.mxu0 0.0
    %2179 = vmatprep.subr.mxu0 0.0
    %2180 = vmatpush2.msra.mxu0 0.0
    %2181 = vmatprep.subr.mxu0 0.0
    %2182 = vmatpush2.msra.mxu0 0.0
    %2183 = vmatprep.subr.mxu0 0.0
    %2184 = vmatpush2.msra.mxu0 0.0
    %2185 = vmatprep.subr.mxu0 0.0
    %2186 = vmatpush2.msra.mxu0 0.0
    %2187 = vmatprep.subr.mxu0 0.0
    %2188 = vmatpush2.msra.mxu0 0.0
    %2189 = vmatprep.subr.mxu0 0.0
    %2190 = vmatpush2.msra.mxu0 0.0
    %2191 = vmatprep.subr.mxu0 0.0
    %2192 = vmatpush2.msra.mxu0 0.0
    %2193 = vmatprep.subr.mxu0 0.0
    %2194 = vmatpush2.msra.mxu0 0.0
    %2195 = vmatprep.subr.mxu0 0.0
    %2196 = vmatpush2.msra.mxu0 0.0
    %2197 = vmatprep.subr.mxu0 0.0
    %2198 = vmatpush2.msra.mxu0 0.0
    %2199 = vmatprep.subr.mxu0 0.0
    %2200 = vmatpush2.msra.mxu0 0.0
    %2201 = vmatprep.mubr.f32.mxu0 0.0
    %2202 = vmatmul.mubr.f32.gmra.mxu0 %v2034
    %v2203 = vpop.f32.mrf.mxu0
    %v2204 = vadd.f32 0.0, %v2203
    %v2205 = vpop.f32.mrf.mxu0
    %v2206 = vadd.f32 0.0, %v2205
    %2207 = vdwg.mxu0
    %v2212 = vcombine.low %v2133, %v2135
    %v2213 = vcombine.low %v2204, %v2206
    %v2215 = vunpack.c.l.s4 1966171168
    %v2216 = vunpack.c.0.s8 %v2215
    %v2217 = vlaneseq
    %v2218 = vshrl.u32 %v2217, 7
    %v2219 = vsub.s32 %v2216, %v2218
    %v2220 = vrot.slane %v2212, %v2219
    %v2222 = vunpack.c.l.s4 1966171168
    %v2223 = vunpack.c.0.s8 %v2222
    %v2224 = vlaneseq
    %v2225 = vshrl.u32 %v2224, 7
    %v2226 = vsub.s32 %v2223, %v2225
    %v2227 = vrot.slane %v2213, %v2226
    %v2228 = vcombine.low %v2220, %v2227
    %v2229 = vcombine.high %v2220, %v2227
    %v2231 = vunpack.c.l.s4 1966171168
    %v2232 = vunpack.c.0.s8 %v2231
    %v2233 = vlaneseq
    %v2234 = vshrl.u32 %v2233, 7
    %v2235 = vsub.s32 %v2232, %v2234
    %v2236 = vrot.slane %v2228, %v2235
    %v2238 = vunpack.c.l.s4 1966171168
    %v2239 = vunpack.c.0.s8 %v2238
    %v2240 = vlaneseq
    %v2241 = vshrl.u32 %v2240, 7
    %v2242 = vsub.s32 %v2239, %v2241
    %v2243 = vrot.slane %v2229, %v2242
    %v2246 = vadd.f32 %v2063, %v2236
    %v2247 = vadd.f32 %v2065, %v2243
    %v2248 = vxor.u32 %v2246, 2147483648
    %v2249 = vxor.u32 %v2247, 2147483648
    %v2250 = vmul.f32 %v2248, 1.442695
    %v2251 = vpow.pop %v2250
    %v2252 = vmul.f32 %v2249, 1.442695
    %v2253 = vpow.pop %v2252
    %v2254 = vadd.f32 %v2251, 1.0
    %v2255 = vadd.f32 %v2253, 1.0
    %v2256 = vrcp.pop %v2254
    %v2257 = vmul.f32 1.0, %v2256
    %v2258 = vrcp.pop %v2255
    %v2259 = vmul.f32 1.0, %v2258
    %v2262 = vrot.slane %v2246, 3
    %v2263 = vrot.slane %v2247, 3
    %v2266 = vtanh.pop %v2262
    %v2267 = vtanh.pop %v2263
    %v2270 = vcombine.low %v2257, %v2259
    %v2272 = vunpack.c.l.s4 1966171168
    %v2273 = vunpack.c.0.s8 %v2272
    %v2274 = vlaneseq
    %v2275 = vshrl.u32 %v2274, 7
    %v2276 = vsub.s32 %v2273, %v2275
    %v2277 = vrot.slane %v2270, %v2276
    %v2279 = vunpack.c.l.s4 1966171168
    %v2280 = vunpack.c.0.s8 %v2279
    %v2281 = vlaneseq
    %v2282 = vshrl.u32 %v2281, 7
    %v2283 = vsub.s32 %v2280, %v2282
    %v2284 = vrot.slane %v2277, %v2283
    %v2286 = vmul.f32 %v2030, %v2284
    %v2287 = vrot.slane %v2257, 1
    %v2288 = vrot.slane %v2259, 1
    %v2291 = vmul.f32 %v2266, %v2287
    %v2292 = vmul.f32 %v2267, %v2288
    %v2295 = vcombine.low %v2291, %v2292
    %v2297 = vunpack.c.l.s4 1966171168
    %v2298 = vunpack.c.0.s8 %v2297
    %v2299 = vlaneseq
    %v2300 = vshrl.u32 %v2299, 7
    %v2301 = vsub.s32 %v2298, %v2300
    %v2302 = vrot.slane %v2295, %v2301
    %v2304 = vunpack.c.l.s4 1966171168
    %v2305 = vunpack.c.0.s8 %v2304
    %v2306 = vlaneseq
    %v2307 = vshrl.u32 %v2306, 7
    %v2308 = vsub.s32 %v2305, %v2307
    %v2309 = vrot.slane %v2302, %v2308
    %v2311 = vadd.f32 %v2286, %v2309
    %v2312 = vtanh.pop %v2311
    %v2313 = vcombine.high %v2284, %v2284
    %v2315 = vmul.f32 %v2312, %v2313
    %v2318 = vunpack.c.l.s4 1966171168
    %v2319 = vunpack.c.0.s8 %v2318
    %v2320 = vlaneseq
    %v2321 = vshrl.u32 %v2320, 7
    %v2322 = vsub.s32 %v2319, %v2321
    %v2323 = vrot.slane %v2315, %v2322
    %v2324 = vcombine.high %v2323, %v2323
    %v2326 = vunpack.c.l.s4 1966171168
    %v2327 = vunpack.c.0.s8 %v2326
    %v2328 = vlaneseq
    %v2329 = vshrl.u32 %v2328, 7
    %v2330 = vsub.s32 %v2327, %v2329
    %v2331 = vrot.slane %v2323, %v2330
    %v2333 = vunpack.c.l.s4 1966171168
    %v2334 = vunpack.c.0.s8 %v2333
    %v2335 = vlaneseq
    %v2336 = vshrl.u32 %v2335, 7
    %v2337 = vsub.s32 %v2334, %v2336
    %v2338 = vrot.slane %v2324, %v2337
    %2341 = vst [vmem:[#allocation2 + $0x7] sm:$0x1] %v2331
    %2342 = vst [vmem:[#allocation2 + $0xf] sm:$0x1] %v2338
    %2343 = vst [vmem:[#allocation4] sm:$0x3] %v2315
    %2344 = vst [vmem:[#allocation6] sm:$0x3] %v2311
    // Predicated region
    $region22: #{lstm_forward.3} parent=1 // pred_check
      _
    $region23: #{lstm_forward.3} parent=1 // pred_check_branch
      %2346 = sbr.rel (0) target = $region25
    $region24: #{lstm_forward.3} parent=1 // pred_region
      %s2348 = ssub.s32 256, 256
      %2349 = vsyncadd [#allocation3], %s2348
      %s2350 = sshll.u32 [#allocation2], 4
      %s2351 = int_to_ptr.vmem [resolvable:$true] %s2350
      %2356 = dma.vmem_to_hbm [thread:$0]  %s2351, 256, %s4, [#allocation3], 128, 128, 8
    $region25: #{lstm_forward.3} parent=1 // pred_fallthru
      _
    // Predicated region
    $region26: #{lstm_forward.3} parent=1 // pred_check
      _
    $region27: #{lstm_forward.3} parent=1 // pred_check_branch
      %2358 = sbr.rel (0) target = $region29
    $region28: #{lstm_forward.3} parent=1 // pred_region
      %s2360 = ssub.s32 32, 32
      %2361 = vsyncadd [#allocation5], %s2360
      %s2363 = sshll.u32 [#allocation4], 4
      %s2364 = int_to_ptr.vmem [resolvable:$true] %s2363
      %2366 = dma.vmem_to_hbm [thread:$0]  %s2364, 32, %s5, [#allocation5]
    $region29: #{lstm_forward.3} parent=1 // pred_fallthru
      _
    // Predicated region
    $region30: #{lstm_forward.3} parent=1 // pred_check
      _
    $region31: #{lstm_forward.3} parent=1 // pred_check_branch
      %2368 = sbr.rel (0) target = $region33
    $region32: #{lstm_forward.3} parent=1 // pred_region
      %s2370 = ssub.s32 32, 32
      %2371 = vsyncadd [#allocation5], %s2370
      %s2373 = sshll.u32 [#allocation6], 4
      %s2374 = int_to_ptr.vmem [resolvable:$true] %s2373
      %2376 = dma.vmem_to_hbm [thread:$0]  %s2374, 32, %s6, [#allocation5]
    $region33: #{lstm_forward.3} parent=1 // pred_fallthru
      _
    // Predicated region
    $region34: #{lstm_forward.3} parent=1 // pred_check
      _
    $region35: #{lstm_forward.3} parent=1 // pred_check_branch
      %2378 = sbr.rel (0) target = $region37
    $region36: #{lstm_forward.3} parent=1 // pred_region
      %2379 = dma.done [#allocation3], 256
    $region37: #{lstm_forward.3} parent=1 // pred_fallthru
      _
    // Predicated region
    $region38: #{lstm_forward.3} parent=1 // pred_check
      _
    $region39: #{lstm_forward.3} parent=1 // pred_check_branch
      %2381 = sbr.rel (0) target = $region41
    $region40: #{lstm_forward.3} parent=1 // pred_region
      %2382 = dma.done [#allocation5], 32
    $region41: #{lstm_forward.3} parent=1 // pred_fallthru
      _
    // Predicated region
    $region42: #{lstm_forward.3} parent=1 // pred_check
      _
    $region43: #{lstm_forward.3} parent=1 // pred_check_branch
      %2384 = sbr.rel (0) target = $region45
    $region44: #{lstm_forward.3} parent=1 // pred_region
      %2385 = dma.done [#allocation5], 32
    $region45: #{lstm_forward.3} parent=1 // pred_fallthru
      _
    %2386 = vsyncpa [#allocation3], 1
    %2387 = vsyncpa [#allocation5], 1

</llo_original>
